<compile_context>
chip_gen: v7x
topology: tpu7x:2x2x1
jax: 0.10.0
libtpu: 0.0.40
codegen_flags: <defaults>
</compile_context>

<pallas_src>
import functools

import jax
import jax.numpy as jnp
from jax.experimental import pallas as pl
from jax.experimental.pallas import tpu as pltpu


def _round_up(x, m):
    return ((x + m - 1) // m) * m


def _pick_tm(batch):
    """Generation-gated tile size: 1 big tile on v5e/v6e, >=2 tiles on v7x."""
    try:
        kind = jax.devices()[0].device_kind.lower()
        n_tc = 2 if ("v7" in kind or "7x" in kind) else 1
    except Exception:  # CPU/interpret fallback
        n_tc = 1
    cap = 1024                       # ~1 MiB/tile streamed; VMEM is a non-issue
    tm = _round_up(pl.cdiv(batch, n_tc), 8)
    return max(8, min(tm, cap))


def toad_vae_kernel(x_ref, eps_ref,
                    w1_ref, b1_ref,
                    w2_ref, b2_ref,
                    w31_ref, b31_ref,
                    w4_ref, b4_ref,
                    recon_ref, mulv_ref, *, latent_dims):
    L = latent_dims

    # ---- encode: fc1 -> relu --------------------------------------------
    x = x_ref[...]                                                     # (TM, D_in) bf16
    h1 = jnp.dot(x, w1_ref[...], preferred_element_type=jnp.float32)  # f32 acc
    h1 = jnp.maximum(h1 + b1_ref[...], 0.0)                           # (TM, H)

    # ---- fused, lane-padded fc21|fc22 -> [mu | logvar | 0pad] -----------
    # w2/b2 are padded to a 128-lane multiple host-side, so this matmul and
    # its store are fully lane-dense.
    mulv = jnp.dot(h1.astype(jnp.bfloat16), w2_ref[...],
                   preferred_element_type=jnp.float32) + b2_ref[...]  # (TM, MULV_W)
    mulv_ref[...] = mulv

    mu = mulv[:, :L]
    logvar = mulv[:, L:2 * L]

    # ---- reparameterize (f32 elementwise; exp on EUP) --------------------
    eps = eps_ref[...][:, :L]          # full unmasked 128-lane load, slice in-reg
    std = jnp.exp(0.5 * logvar)
    z = mu + eps * std                                                 # (TM, L)

    # ---- decode: fc31 -> fc4 -> relu -> sigmoid --------------------------
    h31 = jnp.dot(z.astype(jnp.bfloat16), w31_ref[...],
                  preferred_element_type=jnp.float32) + b31_ref[...]  # (TM, H)
    h4 = jnp.dot(h31.astype(jnp.bfloat16), w4_ref[...],
                 preferred_element_type=jnp.float32) + b4_ref[...]    # (TM, D_in)
    h4 = jnp.maximum(h4, 0.0)

    recon_ref[...] = jax.nn.sigmoid(h4)


def toad_patch_vae_forward(x, eps, params, C, patch_size, latent_dims, tm=None):
    """x: (B, C, P, P) f32, eps: (B, L) f32.

    Returns (recon (B, C, P, P) f32, mu (B, L) f32, logvar (B, L) f32);
    each patch goes through the PyTorch module's forward().
    """
    B = x.shape[0]
    D_in = C * patch_size * patch_size
    L = latent_dims
    mulv_w = params[3].shape[-1]                 # fused+padded [mu|logvar] width
    eps_w = _round_up(L, 128)                    # lane-dense eps stream

    # torch.flatten of a contiguous NCHW patch == row-major reshape.
    x_flat = x.reshape(B, D_in).astype(jnp.bfloat16)   # stream x as bf16
    eps_p = eps.astype(jnp.float32)
    if eps_w != L:
        eps_p = jnp.pad(eps_p, ((0, 0), (0, eps_w - L)))

    if tm is None:
        tm = _pick_tm(B)
    n_tiles = pl.cdiv(B, tm)
    B_pad = n_tiles * tm
    if B_pad != B:                               # no-op when tm divides B
        x_flat = jnp.pad(x_flat, ((0, B_pad - B), (0, 0)))
        eps_p = jnp.pad(eps_p, ((0, B_pad - B), (0, 0)))

    row = lambda i: (i, 0)                       # stream per grid step
    const = lambda i: (0, 0)                     # weights stay VMEM-resident
    weight_specs = [pl.BlockSpec(p.shape, const) for p in params]

    recon, mulv = pl.pallas_call(
        functools.partial(toad_vae_kernel, latent_dims=L),
        grid=(n_tiles,),
        in_specs=[pl.BlockSpec((tm, D_in), row),      # x tile (bf16)
                  pl.BlockSpec((tm, eps_w), row)]     # eps tile (128-lane dense)
                 + weight_specs,
        out_specs=(pl.BlockSpec((tm, D_in), row),     # recon tile (lane-dense)
                   pl.BlockSpec((tm, mulv_w), row)),  # [mu|logvar|pad] tile
        out_shape=(jax.ShapeDtypeStruct((B_pad, D_in), jnp.float32),
                   jax.ShapeDtypeStruct((B_pad, mulv_w), jnp.float32)),
        compiler_params=pltpu.CompilerParams(
            dimension_semantics=("parallel",),        # v7x: tiles over 2 TCs
            vmem_limit_bytes=32 * 1024 * 1024),
    )(x_flat, eps_p, *params)

    recon = recon[:B].reshape(B, C, patch_size, patch_size)
    mu = mulv[:B, :L]
    logvar = mulv[:B, L:2 * L]
    return recon, mu, logvar


def ref_forward(x, eps, params, C, patch_size, latent_dims):
    """Pure-JAX reference with the same bf16-matmul / f32-elementwise scheme."""
    w1, b1, w2, b2, w31, b31, w4, b4 = params
    B = x.shape[0]
    L = latent_dims
    xf = x.reshape(B, -1).astype(jnp.bfloat16)
    h1 = jnp.maximum(
        jnp.dot(xf, w1, preferred_element_type=jnp.float32) + b1, 0.0)
    mulv = jnp.dot(h1.astype(jnp.bfloat16), w2,
                   preferred_element_type=jnp.float32) + b2
    mu, logvar = mulv[:, :L], mulv[:, L:2 * L]
    z = mu + eps * jnp.exp(0.5 * logvar)
    h31 = jnp.dot(z.astype(jnp.bfloat16), w31,
                  preferred_element_type=jnp.float32) + b31
    h4 = jnp.maximum(
        jnp.dot(h31.astype(jnp.bfloat16), w4,
                preferred_element_type=jnp.float32) + b4, 0.0)
    recon = jax.nn.sigmoid(h4).reshape(B, C, patch_size, patch_size)
    return recon, mu, logvar


def init_linear(kw, kb, fan_in, fan_out):
    """PyTorch nn.Linear default init (uniform +-1/sqrt(fan_in)); weight is
    stored transposed as (fan_in, fan_out) and cast to bf16 for the MXU;
    bias stays f32 (added after the f32 accumulation)."""
    bound = 1.0 / jnp.sqrt(jnp.float32(fan_in))
    w = jax.random.uniform(kw, (fan_in, fan_out), jnp.float32, -bound, bound)
    b = jax.random.uniform(kb, (1, fan_out), jnp.float32, -bound, bound)
    return w.astype(jnp.bfloat16), b


if __name__ == "__main__":
    C = 4
    patch_size = 8
    latent_dims = 32
    hidden_dims = patch_size * patch_size           # 64
    input_dims = C * patch_size * patch_size        # 256
    B = 256                                         # batch of independent patches

    key = jax.random.PRNGKey(0)
    keys = jax.random.split(key, 16)

    w1, b1 = init_linear(keys[0], keys[1], input_dims, hidden_dims)
    w21, b21 = init_linear(keys[2], keys[3], hidden_dims, latent_dims)
    w22, b22 = init_linear(keys[4], keys[5], hidden_dims, latent_dims)
    w31, b31 = init_linear(keys[6], keys[7], latent_dims, hidden_dims)
    # fc32 exists in the module but is never used in forward(); omitted.
    w4, b4 = init_linear(keys[10], keys[11], hidden_dims, input_dims)

    # Fuse fc21/fc22 into one weight/bias and zero-pad the output dim to a
    # 128-lane multiple so the [mu|logvar] matmul/store is lane-dense.
    mulv_w = _round_up(2 * latent_dims, 128)
    w2 = jnp.pad(jnp.concatenate([w21, w22], axis=1),
                 ((0, 0), (0, mulv_w - 2 * latent_dims)))
    b2 = jnp.pad(jnp.concatenate([b21, b22], axis=1),
                 ((0, 0), (0, mulv_w - 2 * latent_dims)))

    params = (w1, b1, w2, b2, w31, b31, w4, b4)

    x = jax.random.uniform(keys[12], (B, C, patch_size, patch_size), jnp.float32)
    # TODO(synk): torch.randn_like inside reparameterize() is sampled
    # host-side (semantically equivalent, not bit-identical to torch's RNG).
    eps = jax.random.normal(keys[13], (B, latent_dims), jnp.float32)

    recon, mu, logvar = toad_patch_vae_forward(
        x, eps, params, C, patch_size, latent_dims)
    jax.block_until_ready((recon, mu, logvar))

    assert recon.shape == (B, C, patch_size, patch_size)
    assert mu.shape == (B, latent_dims)
    assert logvar.shape == (B, latent_dims)

    # Numerical sanity check against a same-precision pure-JAX reference.
    r_ref, mu_ref, lv_ref = ref_forward(x, eps, params, C, patch_size, latent_dims)
    assert jnp.allclose(recon, r_ref, atol=2e-3, rtol=2e-3)
    assert jnp.allclose(mu, mu_ref, atol=2e-3, rtol=2e-3)
    assert jnp.allclose(logvar, lv_ref, atol=2e-3, rtol=2e-3)

    print("KERNEL_OK")
</pallas_src>

<mosaic_0001>
module attributes {stable_mosaic.version = 11 : i64} {
  func.func @toad_vae_kernel(%arg0: i32, %arg1: memref<256x256xbf16, #tpu.memory_space<vmem>>, %arg2: memref<256x128xf32, #tpu.memory_space<vmem>>, %arg3: memref<256x64xbf16, #tpu.memory_space<vmem>>, %arg4: memref<1x64xf32, #tpu.memory_space<vmem>>, %arg5: memref<64x128xbf16, #tpu.memory_space<vmem>>, %arg6: memref<1x128xf32, #tpu.memory_space<vmem>>, %arg7: memref<32x64xbf16, #tpu.memory_space<vmem>>, %arg8: memref<1x64xf32, #tpu.memory_space<vmem>>, %arg9: memref<64x256xbf16, #tpu.memory_space<vmem>>, %arg10: memref<1x256xf32, #tpu.memory_space<vmem>>, %arg11: memref<256x256xf32, #tpu.memory_space<vmem>>, %arg12: memref<256x128xf32, #tpu.memory_space<vmem>>) attributes {dimension_semantics = [#tpu.dimension_semantics<parallel>], iteration_bounds = array<i64: 1>, scalar_prefetch = 0 : i64, scratch_operands = 0 : i64, tpu.core_type = #tpu.core_type<tc>, window_params = [{transform_indices = @transform_0, window_bounds = array<i64: 256, 256>}, {transform_indices = @transform_1, window_bounds = array<i64: 256, 128>}, {pipeline_mode = #tpu.pipeline_mode<synchronous>, transform_indices = @transform_2, window_bounds = array<i64: 256, 64>}, {pipeline_mode = #tpu.pipeline_mode<synchronous>, transform_indices = @transform_3, window_bounds = array<i64: 1, 64>}, {pipeline_mode = #tpu.pipeline_mode<synchronous>, transform_indices = @transform_4, window_bounds = array<i64: 64, 128>}, {pipeline_mode = #tpu.pipeline_mode<synchronous>, transform_indices = @transform_5, window_bounds = array<i64: 1, 128>}, {pipeline_mode = #tpu.pipeline_mode<synchronous>, transform_indices = @transform_6, window_bounds = array<i64: 32, 64>}, {pipeline_mode = #tpu.pipeline_mode<synchronous>, transform_indices = @transform_7, window_bounds = array<i64: 1, 64>}, {pipeline_mode = #tpu.pipeline_mode<synchronous>, transform_indices = @transform_8, window_bounds = array<i64: 64, 256>}, {pipeline_mode = #tpu.pipeline_mode<synchronous>, transform_indices = @transform_9, window_bounds = array<i64: 1, 256>}, {transform_indices = @transform_10, window_bounds = array<i64: 256, 256>}, {transform_indices = @transform_11, window_bounds = array<i64: 256, 128>}]} {
    %c0 = arith.constant 0 : index
    %c0_0 = arith.constant 0 : index
    %0 = vector.load %arg1[%c0, %c0_0] : memref<256x256xbf16, #tpu.memory_space<vmem>>, vector<256x256xbf16>
    %c0_1 = arith.constant 0 : index
    %c0_2 = arith.constant 0 : index
    %1 = vector.load %arg3[%c0_1, %c0_2] : memref<256x64xbf16, #tpu.memory_space<vmem>>, vector<256x64xbf16>
    %cst = arith.constant dense<0.000000e+00> : vector<256x64xf32>
    %2 = tpu.matmul %0, %1, %cst {dimension_numbers = #tpu.dot_dimension_numbers<[1], [0], [0], [1], [0, 0, 1, 1], [], []>} : vector<256x256xbf16>, vector<256x64xbf16>, vector<256x64xf32> -> vector<256x64xf32>
    %c0_3 = arith.constant 0 : index
    %c0_4 = arith.constant 0 : index
    %3 = vector.load %arg4[%c0_3, %c0_4] : memref<1x64xf32, #tpu.memory_space<vmem>>, vector<1x64xf32>
    %4 = vector.broadcast %3 : vector<1x64xf32> to vector<256x64xf32>
    %5 = arith.addf %2, %4 : vector<256x64xf32>
    %cst_5 = arith.constant 0.000000e+00 : f32
    %6 = vector.broadcast %cst_5 : f32 to vector<256x64xf32>
    %7 = arith.maximumf %5, %6 : vector<256x64xf32>
    %8 = arith.truncf %7 : vector<256x64xf32> to vector<256x64xbf16>
    %c0_6 = arith.constant 0 : index
    %c0_7 = arith.constant 0 : index
    %9 = vector.load %arg5[%c0_6, %c0_7] : memref<64x128xbf16, #tpu.memory_space<vmem>>, vector<64x128xbf16>
    %cst_8 = arith.constant dense<0.000000e+00> : vector<256x128xf32>
    %10 = tpu.matmul %8, %9, %cst_8 {dimension_numbers = #tpu.dot_dimension_numbers<[1], [0], [0], [1], [0, 0, 1, 1], [], []>} : vector<256x64xbf16>, vector<64x128xbf16>, vector<256x128xf32> -> vector<256x128xf32>
    %c0_9 = arith.constant 0 : index
    %c0_10 = arith.constant 0 : index
    %11 = vector.load %arg6[%c0_9, %c0_10] : memref<1x128xf32, #tpu.memory_space<vmem>>, vector<1x128xf32>
    %12 = vector.broadcast %11 : vector<1x128xf32> to vector<256x128xf32>
    %13 = arith.addf %10, %12 : vector<256x128xf32>
    %c0_11 = arith.constant 0 : index
    %c0_12 = arith.constant 0 : index
    %14 = vector.load %arg12[%c0_11, %c0_12] : memref<256x128xf32, #tpu.memory_space<vmem>>, vector<256x128xf32>
    tpu.vector_store %arg12[%c0_11, %c0_12], %13 {strides = array<i32>} : memref<256x128xf32, #tpu.memory_space<vmem>>, vector<256x128xf32>,
    %15 = vector.extract_strided_slice %13 {offsets = [0, 0], sizes = [256, 32], strides = [1, 1]} : vector<256x128xf32> to vector<256x32xf32>
    %16 = vector.extract_strided_slice %13 {offsets = [0, 32], sizes = [256, 32], strides = [1, 1]} : vector<256x128xf32> to vector<256x32xf32>
    %c0_13 = arith.constant 0 : index
    %c0_14 = arith.constant 0 : index
    %17 = vector.load %arg2[%c0_13, %c0_14] : memref<256x128xf32, #tpu.memory_space<vmem>>, vector<256x128xf32>
    %18 = vector.extract_strided_slice %17 {offsets = [0, 0], sizes = [256, 32], strides = [1, 1]} : vector<256x128xf32> to vector<256x32xf32>
    %cst_15 = arith.constant 5.000000e-01 : f32
    %19 = vector.broadcast %cst_15 : f32 to vector<256x32xf32>
    %20 = arith.mulf %19, %16 : vector<256x32xf32>
    %21 = math.exp %20 : vector<256x32xf32>
    %22 = arith.mulf %18, %21 : vector<256x32xf32>
    %23 = arith.addf %15, %22 : vector<256x32xf32>
    %24 = arith.truncf %23 : vector<256x32xf32> to vector<256x32xbf16>
    %c0_16 = arith.constant 0 : index
    %c0_17 = arith.constant 0 : index
    %25 = vector.load %arg7[%c0_16, %c0_17] : memref<32x64xbf16, #tpu.memory_space<vmem>>, vector<32x64xbf16>
    %cst_18 = arith.constant dense<0.000000e+00> : vector<256x64xf32>
    %26 = tpu.matmul %24, %25, %cst_18 {dimension_numbers = #tpu.dot_dimension_numbers<[1], [0], [0], [1], [0, 0, 1, 1], [], []>} : vector<256x32xbf16>, vector<32x64xbf16>, vector<256x64xf32> -> vector<256x64xf32>
    %c0_19 = arith.constant 0 : index
    %c0_20 = arith.constant 0 : index
    %27 = vector.load %arg8[%c0_19, %c0_20] : memref<1x64xf32, #tpu.memory_space<vmem>>, vector<1x64xf32>
    %28 = vector.broadcast %27 : vector<1x64xf32> to vector<256x64xf32>
    %29 = arith.addf %26, %28 : vector<256x64xf32>
    %30 = arith.truncf %29 : vector<256x64xf32> to vector<256x64xbf16>
    %c0_21 = arith.constant 0 : index
    %c0_22 = arith.constant 0 : index
    %31 = vector.load %arg9[%c0_21, %c0_22] : memref<64x256xbf16, #tpu.memory_space<vmem>>, vector<64x256xbf16>
    %cst_23 = arith.constant dense<0.000000e+00> : vector<256x256xf32>
    %32 = tpu.matmul %30, %31, %cst_23 {dimension_numbers = #tpu.dot_dimension_numbers<[1], [0], [0], [1], [0, 0, 1, 1], [], []>} : vector<256x64xbf16>, vector<64x256xbf16>, vector<256x256xf32> -> vector<256x256xf32>
    %c0_24 = arith.constant 0 : index
    %c0_25 = arith.constant 0 : index
    %33 = vector.load %arg10[%c0_24, %c0_25] : memref<1x256xf32, #tpu.memory_space<vmem>>, vector<1x256xf32>
    %34 = vector.broadcast %33 : vector<1x256xf32> to vector<256x256xf32>
    %35 = arith.addf %32, %34 : vector<256x256xf32>
    %cst_26 = arith.constant 0.000000e+00 : f32
    %36 = vector.broadcast %cst_26 : f32 to vector<256x256xf32>
    %37 = arith.maximumf %35, %36 : vector<256x256xf32>
    %38 = arith.negf %37 : vector<256x256xf32>
    %39 = math.exp %38 : vector<256x256xf32>
    %cst_27 = arith.constant 1.000000e+00 : f32
    %40 = vector.broadcast %cst_27 : f32 to vector<256x256xf32>
    %41 = arith.addf %40, %39 : vector<256x256xf32>
    %42 = arith.divf %40, %41 : vector<256x256xf32>
    %c0_28 = arith.constant 0 : index
    %c0_29 = arith.constant 0 : index
    %43 = vector.load %arg11[%c0_28, %c0_29] : memref<256x256xf32, #tpu.memory_space<vmem>>, vector<256x256xf32>
    tpu.vector_store %arg11[%c0_28, %c0_29], %42 {strides = array<i32>} : memref<256x256xf32, #tpu.memory_space<vmem>>, vector<256x256xf32>,
    return
  }
  func.func @transform_0(%arg0: i32) -> (i32, i32) {
    %c0_i32 = arith.constant 0 : i32
    %c0_i32_0 = arith.constant 0 : i32
    return %arg0, %c0_i32 : i32, i32
  }
  func.func @transform_1(%arg0: i32) -> (i32, i32) {
    %c0_i32 = arith.constant 0 : i32
    %c0_i32_0 = arith.constant 0 : i32
    return %arg0, %c0_i32 : i32, i32
  }
  func.func @transform_2(%arg0: i32) -> (i32, i32) {
    %c0_i32 = arith.constant 0 : i32
    %c0_i32_0 = arith.constant 0 : i32
    %c0_i32_1 = arith.constant 0 : i32
    return %c0_i32, %c0_i32_0 : i32, i32
  }
  func.func @transform_3(%arg0: i32) -> (i32, i32) {
    %c0_i32 = arith.constant 0 : i32
    %c0_i32_0 = arith.constant 0 : i32
    %c0_i32_1 = arith.constant 0 : i32
    return %c0_i32, %c0_i32_0 : i32, i32
  }
  func.func @transform_4(%arg0: i32) -> (i32, i32) {
    %c0_i32 = arith.constant 0 : i32
    %c0_i32_0 = arith.constant 0 : i32
    %c0_i32_1 = arith.constant 0 : i32
    return %c0_i32, %c0_i32_0 : i32, i32
  }
  func.func @transform_5(%arg0: i32) -> (i32, i32) {
    %c0_i32 = arith.constant 0 : i32
    %c0_i32_0 = arith.constant 0 : i32
    %c0_i32_1 = arith.constant 0 : i32
    return %c0_i32, %c0_i32_0 : i32, i32
  }
  func.func @transform_6(%arg0: i32) -> (i32, i32) {
    %c0_i32 = arith.constant 0 : i32
    %c0_i32_0 = arith.constant 0 : i32
    %c0_i32_1 = arith.constant 0 : i32
    return %c0_i32, %c0_i32_0 : i32, i32
  }
  func.func @transform_7(%arg0: i32) -> (i32, i32) {
    %c0_i32 = arith.constant 0 : i32
    %c0_i32_0 = arith.constant 0 : i32
    %c0_i32_1 = arith.constant 0 : i32
    return %c0_i32, %c0_i32_0 : i32, i32
  }
  func.func @transform_8(%arg0: i32) -> (i32, i32) {
    %c0_i32 = arith.constant 0 : i32
    %c0_i32_0 = arith.constant 0 : i32
    %c0_i32_1 = arith.constant 0 : i32
    return %c0_i32, %c0_i32_0 : i32, i32
  }
  func.func @transform_9(%arg0: i32) -> (i32, i32) {
    %c0_i32 = arith.constant 0 : i32
    %c0_i32_0 = arith.constant 0 : i32
    %c0_i32_1 = arith.constant 0 : i32
    return %c0_i32, %c0_i32_0 : i32, i32
  }
  func.func @transform_10(%arg0: i32) -> (i32, i32) {
    %c0_i32 = arith.constant 0 : i32
    %c0_i32_0 = arith.constant 0 : i32
    return %arg0, %c0_i32 : i32, i32
  }
  func.func @transform_11(%arg0: i32) -> (i32, i32) {
    %c0_i32 = arith.constant 0 : i32
    %c0_i32_0 = arith.constant 0 : i32
    return %arg0, %c0_i32 : i32, i32
  }
}

</mosaic_0001>

<llo_original>
// kernel: tpu_custom_call.1
$region0: #{tpu_custom_call.1}
  #allocation0 [shape = 'u32[]', space=smem, size = 0x4, offset = 0x4, fixed_abs, tag = 'smem constant byte address 0x4 - core index']
  #allocation1 [shape = 'u32[144,128]{1,0:T(1,128)}', space=vmem, size = 0x12000, scoped, tag = 'internal scratch']
  %s0 = inlined_call_operand.hbm [shape: bf16[256,256], index: 0, kind: input, shape index: {}]
  %s1 = inlined_call_operand.hbm [shape: f32[256,128], index: 1, kind: input, shape index: {}]
  %s2 = inlined_call_operand.vmem [shape: bf16[256,64], index: 2, kind: input, shape index: {}]
  %s3 = inlined_call_operand.vmem [shape: f32[1,64], index: 3, kind: input, shape index: {}]
  %s4 = inlined_call_operand.vmem [shape: bf16[64,128], index: 4, kind: input, shape index: {}]
  %s5 = inlined_call_operand.vmem [shape: f32[1,128], index: 5, kind: input, shape index: {}]
  %s6 = inlined_call_operand.vmem [shape: bf16[32,64], index: 6, kind: input, shape index: {}]
  %s7 = inlined_call_operand.vmem [shape: f32[1,64], index: 7, kind: input, shape index: {}]
  %s8 = inlined_call_operand.vmem [shape: bf16[64,256], index: 8, kind: input, shape index: {}]
  %s9 = inlined_call_operand.vmem [shape: f32[1,256], index: 9, kind: input, shape index: {}]
  %s10 = inlined_call_operand.hbm [shape: f32[256,256], index: 10, kind: output, shape index: {0}]
  %s11 = inlined_call_operand.hbm [shape: f32[256,128], index: 11, kind: output, shape index: {1}]
  %12 = xla_tuple %s10, %s11
  %s13 = sld [smem:[#allocation0]]
  $region66: #{tpu_custom_call.1} parent=0
    _
  %s15 = ssub.s32 1, %s13
  %s16 = scalar_select 0, %s15, %s13
  $region1: #{tpu_custom_call.1} parent=0
    #allocation2 [shape = 'u8[131072]{0}', space=vmem, size = 0x20000, scoped, tag = 'input window, operand 0, single buffered']
    #allocation3 [shape = 's32[1]{0}', space=sflag, size = 0x4, scoped, tag = 'scoped memory for tpu_custom_call.1']
    #allocation4 [shape = 's32[1]{0}', space=sflag, size = 0x4, scoped, tag = 'scoped memory for tpu_custom_call.1']
    #allocation5 [shape = 'u8[131072]{0}', space=vmem, size = 0x20000, scoped, tag = 'input window, operand 1, single buffered']
    #allocation6 [shape = 's32[1]{0}', space=sflag, size = 0x4, scoped, tag = 'scoped memory for tpu_custom_call.1']
    #allocation7 [shape = 'u8[262144]{0}', space=vmem, size = 0x40000, scoped, tag = 'output window, operand 0, single buffered']
    #allocation8 [shape = 'u8[131072]{0}', space=vmem, size = 0x20000, scoped, tag = 'output window, operand 1, single buffered']
    #allocation9 [shape = 's32[1]{0}', space=sflag, size = 0x4, scoped, tag = 'scoped memory for tpu_custom_call.1']
    %17 = vsyncpa [#allocation3], 0
    %18 = vsyncpa [#allocation6], 0
    %19 = vsyncpa [#allocation4], 0
    %20 = vsyncpa [#allocation9], 0
    // Predicated region
    $region2: #{tpu_custom_call.1} parent=1 // pred_check
      _
    $region3: #{tpu_custom_call.1} parent=1 // pred_check_branch
      %22 = sbr.rel (0) target = $region5
    $region4: #{tpu_custom_call.1} parent=1 // pred_region
      %s24 = ssub.s32 4096, 4096
      %25 = vsyncadd [#allocation3], %s24
      %s26 = sshll.u32 [#allocation2], 4
      %s27 = int_to_ptr.vmem [resolvable:$true] %s26
      %32 = dma.hbm_to_vmem [thread:$0]  %s0, 4096, %s27, [#allocation3], 128, 128, 8
    $region5: #{tpu_custom_call.1} parent=1 // pred_fallthru
      _
    // Predicated region
    $region6: #{tpu_custom_call.1} parent=1 // pred_check
      _
    $region7: #{tpu_custom_call.1} parent=1 // pred_check_branch
      %34 = sbr.rel (0) target = $region9
    $region8: #{tpu_custom_call.1} parent=1 // pred_region
      %s36 = ssub.s32 4096, 4096
      %37 = vsyncadd [#allocation6], %s36
      %s38 = sshll.u32 [#allocation5], 4
      %s39 = int_to_ptr.vmem [resolvable:$true] %s38
      %44 = dma.hbm_to_vmem [thread:$0]  %s1, 4096, %s39, [#allocation6], 128, 128, 8
    $region9: #{tpu_custom_call.1} parent=1 // pred_fallthru
      _
    // Predicated region
    $region10: #{tpu_custom_call.1} parent=1 // pred_check
      _
    $region11: #{tpu_custom_call.1} parent=1 // pred_check_branch
      %46 = sbr.rel (0) target = $region13
    $region12: #{tpu_custom_call.1} parent=1 // pred_region
      _
    $region13: #{tpu_custom_call.1} parent=1 // pred_fallthru
      _
    // Predicated region
    $region14: #{tpu_custom_call.1} parent=1 // pred_check
      _
    $region15: #{tpu_custom_call.1} parent=1 // pred_check_branch
      %48 = sbr.rel (0) target = $region17
    $region16: #{tpu_custom_call.1} parent=1 // pred_region
      _
    $region17: #{tpu_custom_call.1} parent=1 // pred_fallthru
      _
    // Predicated region
    $region18: #{tpu_custom_call.1} parent=1 // pred_check
      _
    $region19: #{tpu_custom_call.1} parent=1 // pred_check_branch
      %50 = sbr.rel (0) target = $region21
    $region20: #{tpu_custom_call.1} parent=1 // pred_region
      _
    $region21: #{tpu_custom_call.1} parent=1 // pred_fallthru
      _
    // Predicated region
    $region22: #{tpu_custom_call.1} parent=1 // pred_check
      _
    $region23: #{tpu_custom_call.1} parent=1 // pred_check_branch
      %52 = sbr.rel (0) target = $region25
    $region24: #{tpu_custom_call.1} parent=1 // pred_region
      _
    $region25: #{tpu_custom_call.1} parent=1 // pred_fallthru
      _
    // Predicated region
    $region26: #{tpu_custom_call.1} parent=1 // pred_check
      _
    $region27: #{tpu_custom_call.1} parent=1 // pred_check_branch
      %54 = sbr.rel (0) target = $region29
    $region28: #{tpu_custom_call.1} parent=1 // pred_region
      _
    $region29: #{tpu_custom_call.1} parent=1 // pred_fallthru
      _
    // Predicated region
    $region30: #{tpu_custom_call.1} parent=1 // pred_check
      _
    $region31: #{tpu_custom_call.1} parent=1 // pred_check_branch
      %56 = sbr.rel (0) target = $region33
    $region32: #{tpu_custom_call.1} parent=1 // pred_region
      _
    $region33: #{tpu_custom_call.1} parent=1 // pred_fallthru
      _
    // Predicated region
    $region34: #{tpu_custom_call.1} parent=1 // pred_check
      _
    $region35: #{tpu_custom_call.1} parent=1 // pred_check_branch
      %58 = sbr.rel (0) target = $region37
    $region36: #{tpu_custom_call.1} parent=1 // pred_region
      _
    $region37: #{tpu_custom_call.1} parent=1 // pred_fallthru
      _
    // Predicated region
    $region38: #{tpu_custom_call.1} parent=1 // pred_check
      _
    $region39: #{tpu_custom_call.1} parent=1 // pred_check_branch
      %60 = sbr.rel (0) target = $region41
    $region40: #{tpu_custom_call.1} parent=1 // pred_region
      _
    $region41: #{tpu_custom_call.1} parent=1 // pred_fallthru
      _
    // Predicated region
    $region42: #{tpu_custom_call.1} parent=1 // pred_check
      _
    $region43: #{tpu_custom_call.1} parent=1 // pred_check_branch
      %62 = sbr.rel (0) target = $region45
    $region44: #{tpu_custom_call.1} parent=1 // pred_region
      %63 = dma.done [#allocation3], 4096
    $region45: #{tpu_custom_call.1} parent=1 // pred_fallthru
      _
    // Predicated region
    $region46: #{tpu_custom_call.1} parent=1 // pred_check
      _
    $region47: #{tpu_custom_call.1} parent=1 // pred_check_branch
      %65 = sbr.rel (0) target = $region49
    $region48: #{tpu_custom_call.1} parent=1 // pred_region
      %66 = dma.done [#allocation6], 4096
    $region49: #{tpu_custom_call.1} parent=1 // pred_fallthru
      _
    %v68 = vld [vmem:[#allocation2] sm:$0xff]
    %v69 = vld [vmem:[#allocation2 + $0x8] sm:$0xff]
    %v70 = vld [vmem:[#allocation2 + $0x10] sm:$0xff]
    %v71 = vld [vmem:[#allocation2 + $0x18] sm:$0xff]
    %v72 = vld [vmem:[#allocation2 + $0x20] sm:$0xff]
    %v73 = vld [vmem:[#allocation2 + $0x28] sm:$0xff]
    %v74 = vld [vmem:[#allocation2 + $0x30] sm:$0xff]
    %v75 = vld [vmem:[#allocation2 + $0x38] sm:$0xff]
    %v76 = vld [vmem:[#allocation2 + $0x40] sm:$0xff]
    %v77 = vld [vmem:[#allocation2 + $0x48] sm:$0xff]
    %v78 = vld [vmem:[#allocation2 + $0x50] sm:$0xff]
    %v79 = vld [vmem:[#allocation2 + $0x58] sm:$0xff]
    %v80 = vld [vmem:[#allocation2 + $0x60] sm:$0xff]
    %v81 = vld [vmem:[#allocation2 + $0x68] sm:$0xff]
    %v82 = vld [vmem:[#allocation2 + $0x70] sm:$0xff]
    %v83 = vld [vmem:[#allocation2 + $0x78] sm:$0xff]
    %v84 = vld [vmem:[#allocation2 + $0x80] sm:$0xff]
    %v85 = vld [vmem:[#allocation2 + $0x88] sm:$0xff]
    %v86 = vld [vmem:[#allocation2 + $0x90] sm:$0xff]
    %v87 = vld [vmem:[#allocation2 + $0x98] sm:$0xff]
    %v88 = vld [vmem:[#allocation2 + $0xa0] sm:$0xff]
    %v89 = vld [vmem:[#allocation2 + $0xa8] sm:$0xff]
    %v90 = vld [vmem:[#allocation2 + $0xb0] sm:$0xff]
    %v91 = vld [vmem:[#allocation2 + $0xb8] sm:$0xff]
    %v92 = vld [vmem:[#allocation2 + $0xc0] sm:$0xff]
    %v93 = vld [vmem:[#allocation2 + $0xc8] sm:$0xff]
    %v94 = vld [vmem:[#allocation2 + $0xd0] sm:$0xff]
    %v95 = vld [vmem:[#allocation2 + $0xd8] sm:$0xff]
    %v96 = vld [vmem:[#allocation2 + $0xe0] sm:$0xff]
    %v97 = vld [vmem:[#allocation2 + $0xe8] sm:$0xff]
    %v98 = vld [vmem:[#allocation2 + $0xf0] sm:$0xff]
    %v99 = vld [vmem:[#allocation2 + $0xf8] sm:$0xff]
    %v100 = vld [vmem:[%s2] sm:$0xf]
    %v101 = vld [vmem:[%s2 + $0x4] sm:$0xf]
    %v102 = vld [vmem:[%s2 + $0x8] sm:$0xf]
    %v103 = vld [vmem:[%s2 + $0xc] sm:$0xf]
    %v104 = vld [vmem:[%s2 + $0x10] sm:$0xf]
    %v105 = vld [vmem:[%s2 + $0x14] sm:$0xf]
    %v106 = vld [vmem:[%s2 + $0x18] sm:$0xf]
    %v107 = vld [vmem:[%s2 + $0x1c] sm:$0xf]
    %v108 = vld [vmem:[%s2 + $0x20] sm:$0xf]
    %v109 = vld [vmem:[%s2 + $0x24] sm:$0xf]
    %v110 = vld [vmem:[%s2 + $0x28] sm:$0xf]
    %v111 = vld [vmem:[%s2 + $0x2c] sm:$0xf]
    %v112 = vld [vmem:[%s2 + $0x30] sm:$0xf]
    %v113 = vld [vmem:[%s2 + $0x34] sm:$0xf]
    %v114 = vld [vmem:[%s2 + $0x38] sm:$0xf]
    %v115 = vld [vmem:[%s2 + $0x3c] sm:$0xf]
    %v116 = vld [vmem:[%s2 + $0x40] sm:$0xf]
    %v117 = vld [vmem:[%s2 + $0x44] sm:$0xf]
    %v118 = vld [vmem:[%s2 + $0x48] sm:$0xf]
    %v119 = vld [vmem:[%s2 + $0x4c] sm:$0xf]
    %v120 = vld [vmem:[%s2 + $0x50] sm:$0xf]
    %v121 = vld [vmem:[%s2 + $0x54] sm:$0xf]
    %v122 = vld [vmem:[%s2 + $0x58] sm:$0xf]
    %v123 = vld [vmem:[%s2 + $0x5c] sm:$0xf]
    %v124 = vld [vmem:[%s2 + $0x60] sm:$0xf]
    %v125 = vld [vmem:[%s2 + $0x64] sm:$0xf]
    %v126 = vld [vmem:[%s2 + $0x68] sm:$0xf]
    %v127 = vld [vmem:[%s2 + $0x6c] sm:$0xf]
    %v128 = vld [vmem:[%s2 + $0x70] sm:$0xf]
    %v129 = vld [vmem:[%s2 + $0x74] sm:$0xf]
    %v130 = vld [vmem:[%s2 + $0x78] sm:$0xf]
    %v131 = vld [vmem:[%s2 + $0x7c] sm:$0xf]
    %v132 = vld [vmem:[%s3] sm:$0x1]
    %v134 = vlaneseq
    %v135 = vshrl.u32 %v134, 7
    %v136 = vsub.s32 0, %v135
    %v137 = vrot.slane %v132, %v136
    %v171 = vunpack.c.l.b16 %v68
    %v172 = vunpack.c.h.b16 %v68
    %v173 = vunpack.c.l.b16 %v69
    %v174 = vunpack.c.h.b16 %v69
    %v175 = vunpack.c.l.b16 %v70
    %v176 = vunpack.c.h.b16 %v70
    %v177 = vunpack.c.l.b16 %v71
    %v178 = vunpack.c.h.b16 %v71
    %v179 = vunpack.c.l.b16 %v72
    %v180 = vunpack.c.h.b16 %v72
    %v181 = vunpack.c.l.b16 %v73
    %v182 = vunpack.c.h.b16 %v73
    %v183 = vunpack.c.l.b16 %v74
    %v184 = vunpack.c.h.b16 %v74
    %v185 = vunpack.c.l.b16 %v75
    %v186 = vunpack.c.h.b16 %v75
    %v187 = vunpack.c.l.b16 %v76
    %v188 = vunpack.c.h.b16 %v76
    %v189 = vunpack.c.l.b16 %v77
    %v190 = vunpack.c.h.b16 %v77
    %v191 = vunpack.c.l.b16 %v78
    %v192 = vunpack.c.h.b16 %v78
    %v193 = vunpack.c.l.b16 %v79
    %v194 = vunpack.c.h.b16 %v79
    %v195 = vunpack.c.l.b16 %v80
    %v196 = vunpack.c.h.b16 %v80
    %v197 = vunpack.c.l.b16 %v81
    %v198 = vunpack.c.h.b16 %v81
    %v199 = vunpack.c.l.b16 %v82
    %v200 = vunpack.c.h.b16 %v82
    %v201 = vunpack.c.l.b16 %v83
    %v202 = vunpack.c.h.b16 %v83
    %v203 = vunpack.c.l.b16 %v84
    %v204 = vunpack.c.h.b16 %v84
    %v205 = vunpack.c.l.b16 %v85
    %v206 = vunpack.c.h.b16 %v85
    %v207 = vunpack.c.l.b16 %v86
    %v208 = vunpack.c.h.b16 %v86
    %v209 = vunpack.c.l.b16 %v87
    %v210 = vunpack.c.h.b16 %v87
    %v211 = vunpack.c.l.b16 %v88
    %v212 = vunpack.c.h.b16 %v88
    %v213 = vunpack.c.l.b16 %v89
    %v214 = vunpack.c.h.b16 %v89
    %v215 = vunpack.c.l.b16 %v90
    %v216 = vunpack.c.h.b16 %v90
    %v217 = vunpack.c.l.b16 %v91
    %v218 = vunpack.c.h.b16 %v91
    %v219 = vunpack.c.l.b16 %v92
    %v220 = vunpack.c.h.b16 %v92
    %v221 = vunpack.c.l.b16 %v93
    %v222 = vunpack.c.h.b16 %v93
    %v223 = vunpack.c.l.b16 %v94
    %v224 = vunpack.c.h.b16 %v94
    %v225 = vunpack.c.l.b16 %v95
    %v226 = vunpack.c.h.b16 %v95
    %v227 = vunpack.c.l.b16 %v96
    %v228 = vunpack.c.h.b16 %v96
    %v229 = vunpack.c.l.b16 %v97
    %v230 = vunpack.c.h.b16 %v97
    %v231 = vunpack.c.l.b16 %v98
    %v232 = vunpack.c.h.b16 %v98
    %v233 = vunpack.c.l.b16 %v99
    %v234 = vunpack.c.h.b16 %v99
    %v235 = vpack.c.b16 %v173, %v171
    %v236 = vpack.c.b16 %v174, %v172
    %v237 = vpack.c.b16 %v177, %v175
    %v238 = vpack.c.b16 %v178, %v176
    %v239 = vpack.c.b16 %v181, %v179
    %v240 = vpack.c.b16 %v182, %v180
    %v241 = vpack.c.b16 %v185, %v183
    %v242 = vpack.c.b16 %v186, %v184
    %v243 = vpack.c.b16 %v189, %v187
    %v244 = vpack.c.b16 %v190, %v188
    %v245 = vpack.c.b16 %v193, %v191
    %v246 = vpack.c.b16 %v194, %v192
    %v247 = vpack.c.b16 %v197, %v195
    %v248 = vpack.c.b16 %v198, %v196
    %v249 = vpack.c.b16 %v201, %v199
    %v250 = vpack.c.b16 %v202, %v200
    %v251 = vpack.c.b16 %v205, %v203
    %v252 = vpack.c.b16 %v206, %v204
    %v253 = vpack.c.b16 %v209, %v207
    %v254 = vpack.c.b16 %v210, %v208
    %v255 = vpack.c.b16 %v213, %v211
    %v256 = vpack.c.b16 %v214, %v212
    %v257 = vpack.c.b16 %v217, %v215
    %v258 = vpack.c.b16 %v218, %v216
    %v259 = vpack.c.b16 %v221, %v219
    %v260 = vpack.c.b16 %v222, %v220
    %v261 = vpack.c.b16 %v225, %v223
    %v262 = vpack.c.b16 %v226, %v224
    %v263 = vpack.c.b16 %v229, %v227
    %v264 = vpack.c.b16 %v230, %v228
    %v265 = vpack.c.b16 %v233, %v231
    %v266 = vpack.c.b16 %v234, %v232
    %v331 = vunpack.c.l.b16 %v100
    %v332 = vunpack.c.l.b16 %v101
    %v333 = vunpack.c.l.b16 %v102
    %v334 = vunpack.c.l.b16 %v103
    %v335 = vunpack.c.l.b16 %v104
    %v336 = vunpack.c.l.b16 %v105
    %v337 = vunpack.c.l.b16 %v106
    %v338 = vunpack.c.l.b16 %v107
    %v339 = vunpack.c.l.b16 %v108
    %v340 = vunpack.c.l.b16 %v109
    %v341 = vunpack.c.l.b16 %v110
    %v342 = vunpack.c.l.b16 %v111
    %v343 = vunpack.c.l.b16 %v112
    %v344 = vunpack.c.l.b16 %v113
    %v345 = vunpack.c.l.b16 %v114
    %v346 = vunpack.c.l.b16 %v115
    %v347 = vunpack.c.l.b16 %v116
    %v348 = vunpack.c.l.b16 %v117
    %v349 = vunpack.c.l.b16 %v118
    %v350 = vunpack.c.l.b16 %v119
    %v351 = vunpack.c.l.b16 %v120
    %v352 = vunpack.c.l.b16 %v121
    %v353 = vunpack.c.l.b16 %v122
    %v354 = vunpack.c.l.b16 %v123
    %v355 = vunpack.c.l.b16 %v124
    %v356 = vunpack.c.l.b16 %v125
    %v357 = vunpack.c.l.b16 %v126
    %v358 = vunpack.c.l.b16 %v127
    %v359 = vunpack.c.l.b16 %v128
    %v360 = vunpack.c.l.b16 %v129
    %v361 = vunpack.c.l.b16 %v130
    %v362 = vunpack.c.l.b16 %v131
    %v363 = vpack.c.b16 %v332, %v331
    %v364 = vpack.c.b16 %v334, %v333
    %v365 = vpack.c.b16 %v336, %v335
    %v366 = vpack.c.b16 %v338, %v337
    %v367 = vpack.c.b16 %v340, %v339
    %v368 = vpack.c.b16 %v342, %v341
    %v369 = vpack.c.b16 %v344, %v343
    %v370 = vpack.c.b16 %v346, %v345
    %v371 = vpack.c.b16 %v348, %v347
    %v372 = vpack.c.b16 %v350, %v349
    %v373 = vpack.c.b16 %v352, %v351
    %v374 = vpack.c.b16 %v354, %v353
    %v375 = vpack.c.b16 %v356, %v355
    %v376 = vpack.c.b16 %v358, %v357
    %v377 = vpack.c.b16 %v360, %v359
    %v378 = vpack.c.b16 %v362, %v361
    %395 = vmatprep.subr.bf16.mxu0 0
    %396 = vmatpush1.bf16.msra.mxu0 %v363
    %397 = vmatprep.subr.bf16.mxu0 0
    %398 = vmatpush1.bf16.msra.mxu0 %v364
    %399 = vmatprep.subr.bf16.mxu0 0
    %400 = vmatpush1.bf16.msra.mxu0 %v365
    %401 = vmatprep.subr.bf16.mxu0 0
    %402 = vmatpush1.bf16.msra.mxu0 %v366
    %403 = vmatprep.subr.bf16.mxu0 0
    %404 = vmatpush1.bf16.msra.mxu0 %v367
    %405 = vmatprep.subr.bf16.mxu0 0
    %406 = vmatpush1.bf16.msra.mxu0 %v368
    %407 = vmatprep.subr.bf16.mxu0 0
    %408 = vmatpush1.bf16.msra.mxu0 %v369
    %409 = vmatprep.subr.bf16.mxu0 0
    %410 = vmatpush1.bf16.msra.mxu0 %v370
    %411 = vmatprep.subr.bf16.mxu0 0
    %412 = vmatpush1.bf16.msra.mxu0 %v371
    %413 = vmatprep.subr.bf16.mxu0 0
    %414 = vmatpush1.bf16.msra.mxu0 %v372
    %415 = vmatprep.subr.bf16.mxu0 0
    %416 = vmatpush1.bf16.msra.mxu0 %v373
    %417 = vmatprep.subr.bf16.mxu0 0
    %418 = vmatpush1.bf16.msra.mxu0 %v374
    %419 = vmatprep.subr.bf16.mxu0 0
    %420 = vmatpush1.bf16.msra.mxu0 %v375
    %421 = vmatprep.subr.bf16.mxu0 0
    %422 = vmatpush1.bf16.msra.mxu0 %v376
    %423 = vmatprep.subr.bf16.mxu0 0
    %424 = vmatpush1.bf16.msra.mxu0 %v377
    %425 = vmatprep.subr.bf16.mxu0 0
    %426 = vmatpush1.bf16.msra.mxu0 %v378
    %427 = vmatprep.mubr.bf16.mxu0 %v236
    %428 = vmatmul.mubr.bf16.gmra.mrb[0].mxu0 %v235
    %v429 = vpop.f32.mrb[0].mxu0
    %v430 = vadd.f32 %v137, %v429
    %v431 = vpop.f32.mrb[0].mxu0
    %v432 = vpop.f32.mrb[0].mxu0
    %v433 = vadd.f32 %v137, %v432
    %v434 = vpop.f32.mrb[0].mxu0
    %435 = vmatprep.mubr.bf16.mxu0 %v238
    %436 = vmatmul.mubr.bf16.gmra.mrb[0].mxu0 %v237
    %v437 = vpop.f32.mrb[0].mxu0
    %v438 = vadd.f32 %v137, %v437
    %v439 = vpop.f32.mrb[0].mxu0
    %v440 = vpop.f32.mrb[0].mxu0
    %v441 = vadd.f32 %v137, %v440
    %v442 = vpop.f32.mrb[0].mxu0
    %443 = vmatprep.mubr.bf16.mxu0 %v240
    %444 = vmatmul.mubr.bf16.gmra.mrb[0].mxu0 %v239
    %v445 = vpop.f32.mrb[0].mxu0
    %v446 = vadd.f32 %v137, %v445
    %v447 = vpop.f32.mrb[0].mxu0
    %v448 = vpop.f32.mrb[0].mxu0
    %v449 = vadd.f32 %v137, %v448
    %v450 = vpop.f32.mrb[0].mxu0
    %451 = vmatprep.mubr.bf16.mxu0 %v242
    %452 = vmatmul.mubr.bf16.gmra.mrb[0].mxu0 %v241
    %v453 = vpop.f32.mrb[0].mxu0
    %v454 = vadd.f32 %v137, %v453
    %v455 = vpop.f32.mrb[0].mxu0
    %v456 = vpop.f32.mrb[0].mxu0
    %v457 = vadd.f32 %v137, %v456
    %v458 = vpop.f32.mrb[0].mxu0
    %459 = vmatprep.mubr.bf16.mxu0 %v244
    %460 = vmatmul.mubr.bf16.gmra.mrb[0].mxu0 %v243
    %v461 = vpop.f32.mrb[0].mxu0
    %v462 = vadd.f32 %v137, %v461
    %v463 = vpop.f32.mrb[0].mxu0
    %v464 = vpop.f32.mrb[0].mxu0
    %v465 = vadd.f32 %v137, %v464
    %v466 = vpop.f32.mrb[0].mxu0
    %467 = vmatprep.mubr.bf16.mxu0 %v246
    %468 = vmatmul.mubr.bf16.gmra.mrb[0].mxu0 %v245
    %v469 = vpop.f32.mrb[0].mxu0
    %v470 = vadd.f32 %v137, %v469
    %v471 = vpop.f32.mrb[0].mxu0
    %v472 = vpop.f32.mrb[0].mxu0
    %v473 = vadd.f32 %v137, %v472
    %v474 = vpop.f32.mrb[0].mxu0
    %475 = vmatprep.mubr.bf16.mxu0 %v248
    %476 = vmatmul.mubr.bf16.gmra.mrb[0].mxu0 %v247
    %v477 = vpop.f32.mrb[0].mxu0
    %v478 = vadd.f32 %v137, %v477
    %v479 = vpop.f32.mrb[0].mxu0
    %v480 = vpop.f32.mrb[0].mxu0
    %v481 = vadd.f32 %v137, %v480
    %v482 = vpop.f32.mrb[0].mxu0
    %483 = vmatprep.mubr.bf16.mxu0 %v250
    %484 = vmatmul.mubr.bf16.gmra.mrb[0].mxu0 %v249
    %v485 = vpop.f32.mrb[0].mxu0
    %v486 = vadd.f32 %v137, %v485
    %v487 = vpop.f32.mrb[0].mxu0
    %v488 = vpop.f32.mrb[0].mxu0
    %v489 = vadd.f32 %v137, %v488
    %v490 = vpop.f32.mrb[0].mxu0
    %491 = vmatprep.mubr.bf16.mxu0 %v252
    %492 = vmatmul.mubr.bf16.gmra.mrb[0].mxu0 %v251
    %v493 = vpop.f32.mrb[0].mxu0
    %v494 = vadd.f32 %v137, %v493
    %v495 = vpop.f32.mrb[0].mxu0
    %v496 = vpop.f32.mrb[0].mxu0
    %v497 = vadd.f32 %v137, %v496
    %v498 = vpop.f32.mrb[0].mxu0
    %499 = vmatprep.mubr.bf16.mxu0 %v254
    %500 = vmatmul.mubr.bf16.gmra.mrb[0].mxu0 %v253
    %v501 = vpop.f32.mrb[0].mxu0
    %v502 = vadd.f32 %v137, %v501
    %v503 = vpop.f32.mrb[0].mxu0
    %v504 = vpop.f32.mrb[0].mxu0
    %v505 = vadd.f32 %v137, %v504
    %v506 = vpop.f32.mrb[0].mxu0
    %507 = vmatprep.mubr.bf16.mxu0 %v256
    %508 = vmatmul.mubr.bf16.gmra.mrb[0].mxu0 %v255
    %v509 = vpop.f32.mrb[0].mxu0
    %v510 = vadd.f32 %v137, %v509
    %v511 = vpop.f32.mrb[0].mxu0
    %v512 = vpop.f32.mrb[0].mxu0
    %v513 = vadd.f32 %v137, %v512
    %v514 = vpop.f32.mrb[0].mxu0
    %515 = vmatprep.mubr.bf16.mxu0 %v258
    %516 = vmatmul.mubr.bf16.gmra.mrb[0].mxu0 %v257
    %v517 = vpop.f32.mrb[0].mxu0
    %v518 = vadd.f32 %v137, %v517
    %v519 = vpop.f32.mrb[0].mxu0
    %v520 = vpop.f32.mrb[0].mxu0
    %v521 = vadd.f32 %v137, %v520
    %v522 = vpop.f32.mrb[0].mxu0
    %523 = vmatprep.mubr.bf16.mxu0 %v260
    %524 = vmatmul.mubr.bf16.gmra.mrb[0].mxu0 %v259
    %v525 = vpop.f32.mrb[0].mxu0
    %v526 = vadd.f32 %v137, %v525
    %v527 = vpop.f32.mrb[0].mxu0
    %v528 = vpop.f32.mrb[0].mxu0
    %v529 = vadd.f32 %v137, %v528
    %v530 = vpop.f32.mrb[0].mxu0
    %531 = vmatprep.mubr.bf16.mxu0 %v262
    %532 = vmatmul.mubr.bf16.gmra.mrb[0].mxu0 %v261
    %v533 = vpop.f32.mrb[0].mxu0
    %v534 = vadd.f32 %v137, %v533
    %v535 = vpop.f32.mrb[0].mxu0
    %v536 = vpop.f32.mrb[0].mxu0
    %v537 = vadd.f32 %v137, %v536
    %v538 = vpop.f32.mrb[0].mxu0
    %539 = vmatprep.mubr.bf16.mxu0 %v264
    %540 = vmatmul.mubr.bf16.gmra.mrb[0].mxu0 %v263
    %v541 = vpop.f32.mrb[0].mxu0
    %v542 = vadd.f32 %v137, %v541
    %v543 = vpop.f32.mrb[0].mxu0
    %v544 = vpop.f32.mrb[0].mxu0
    %v545 = vadd.f32 %v137, %v544
    %v546 = vpop.f32.mrb[0].mxu0
    %547 = vmatprep.mubr.bf16.mxu0 %v266
    %548 = vmatmul.mubr.bf16.gmra.mrb[0].mxu0 %v265
    %v549 = vpop.f32.mrb[0].mxu0
    %v550 = vadd.f32 %v137, %v549
    %v551 = vpop.f32.mrb[0].mxu0
    %v552 = vpop.f32.mrb[0].mxu0
    %v553 = vadd.f32 %v137, %v552
    %v554 = vpop.f32.mrb[0].mxu0
    %555 = vdwg.mxu0
    %v556 = vmax.f32 %v430, 0.0
    %v557 = vmax.f32 %v433, 0.0
    %v558 = vmax.f32 %v438, 0.0
    %v559 = vmax.f32 %v441, 0.0
    %v560 = vmax.f32 %v446, 0.0
    %v561 = vmax.f32 %v449, 0.0
    %v562 = vmax.f32 %v454, 0.0
    %v563 = vmax.f32 %v457, 0.0
    %v564 = vmax.f32 %v462, 0.0
    %v565 = vmax.f32 %v465, 0.0
    %v566 = vmax.f32 %v470, 0.0
    %v567 = vmax.f32 %v473, 0.0
    %v568 = vmax.f32 %v478, 0.0
    %v569 = vmax.f32 %v481, 0.0
    %v570 = vmax.f32 %v486, 0.0
    %v571 = vmax.f32 %v489, 0.0
    %v572 = vmax.f32 %v494, 0.0
    %v573 = vmax.f32 %v497, 0.0
    %v574 = vmax.f32 %v502, 0.0
    %v575 = vmax.f32 %v505, 0.0
    %v576 = vmax.f32 %v510, 0.0
    %v577 = vmax.f32 %v513, 0.0
    %v578 = vmax.f32 %v518, 0.0
    %v579 = vmax.f32 %v521, 0.0
    %v580 = vmax.f32 %v526, 0.0
    %v581 = vmax.f32 %v529, 0.0
    %v582 = vmax.f32 %v534, 0.0
    %v583 = vmax.f32 %v537, 0.0
    %v584 = vmax.f32 %v542, 0.0
    %v585 = vmax.f32 %v545, 0.0
    %v586 = vmax.f32 %v550, 0.0
    %v587 = vmax.f32 %v553, 0.0
    %v588 = vpack.c.bf16 %v557, %v556
    %v589 = vpack.c.bf16 %v559, %v558
    %v590 = vpack.c.bf16 %v561, %v560
    %v591 = vpack.c.bf16 %v563, %v562
    %v592 = vpack.c.bf16 %v565, %v564
    %v593 = vpack.c.bf16 %v567, %v566
    %v594 = vpack.c.bf16 %v569, %v568
    %v595 = vpack.c.bf16 %v571, %v570
    %v596 = vpack.c.bf16 %v573, %v572
    %v597 = vpack.c.bf16 %v575, %v574
    %v598 = vpack.c.bf16 %v577, %v576
    %v599 = vpack.c.bf16 %v579, %v578
    %v600 = vpack.c.bf16 %v581, %v580
    %v601 = vpack.c.bf16 %v583, %v582
    %v602 = vpack.c.bf16 %v585, %v584
    %v603 = vpack.c.bf16 %v587, %v586
    %v604 = vld [vmem:[%s4] sm:$0xf]
    %v605 = vld [vmem:[%s4 + $0x4] sm:$0xf]
    %v606 = vld [vmem:[%s4 + $0x8] sm:$0xf]
    %v607 = vld [vmem:[%s4 + $0xc] sm:$0xf]
    %v608 = vld [vmem:[%s4 + $0x10] sm:$0xf]
    %v609 = vld [vmem:[%s4 + $0x14] sm:$0xf]
    %v610 = vld [vmem:[%s4 + $0x18] sm:$0xf]
    %v611 = vld [vmem:[%s4 + $0x1c] sm:$0xf]
    %v612 = vld [vmem:[%s5] sm:$0x1]
    %v614 = vlaneseq
    %v615 = vshrl.u32 %v614, 7
    %v616 = vsub.s32 0, %v615
    %v617 = vrot.slane %v612, %v616
    %v627 = vunpack.c.l.b16 %v604
    %v628 = vunpack.c.l.b16 %v605
    %v629 = vunpack.c.l.b16 %v606
    %v630 = vunpack.c.l.b16 %v607
    %v631 = vunpack.c.l.b16 %v608
    %v632 = vunpack.c.l.b16 %v609
    %v633 = vunpack.c.l.b16 %v610
    %v634 = vunpack.c.l.b16 %v611
    %v635 = vpack.c.b16 %v628, %v627
    %v636 = vpack.c.b16 %v630, %v629
    %v637 = vpack.c.b16 %v632, %v631
    %v638 = vpack.c.b16 %v634, %v633
    %vm643 = vcmask 523264
    %v645 = vsel %vm643, %v588, 0
    %v648 = vsel %vm643, %v589, 0
    %v651 = vsel %vm643, %v590, 0
    %v654 = vsel %vm643, %v591, 0
    %v657 = vsel %vm643, %v592, 0
    %v660 = vsel %vm643, %v593, 0
    %v663 = vsel %vm643, %v594, 0
    %v666 = vsel %vm643, %v595, 0
    %v669 = vsel %vm643, %v596, 0
    %v672 = vsel %vm643, %v597, 0
    %v675 = vsel %vm643, %v598, 0
    %v678 = vsel %vm643, %v599, 0
    %v681 = vsel %vm643, %v600, 0
    %v684 = vsel %vm643, %v601, 0
    %v687 = vsel %vm643, %v602, 0
    %v690 = vsel %vm643, %v603, 0
    %692 = vmatprep.subr.bf16.mxu0 0
    %693 = vmatpush1.bf16.msra.mxu0 %v635
    %694 = vmatprep.subr.bf16.mxu0 0
    %695 = vmatpush1.bf16.msra.mxu0 %v636
    %696 = vmatprep.subr.bf16.mxu0 0
    %697 = vmatpush1.bf16.msra.mxu0 %v637
    %698 = vmatprep.subr.bf16.mxu0 0
    %699 = vmatpush1.bf16.msra.mxu0 %v638
    %700 = vmatprep.subr.bf16.mxu0 0
    %701 = vmatpush1.bf16.msra.mxu0 0
    %702 = vmatprep.subr.bf16.mxu0 0
    %703 = vmatpush1.bf16.msra.mxu0 0
    %704 = vmatprep.subr.bf16.mxu0 0
    %705 = vmatpush1.bf16.msra.mxu0 0
    %706 = vmatprep.subr.bf16.mxu0 0
    %707 = vmatpush1.bf16.msra.mxu0 0
    %708 = vmatprep.subr.bf16.mxu0 0
    %709 = vmatpush1.bf16.msra.mxu0 0
    %710 = vmatprep.subr.bf16.mxu0 0
    %711 = vmatpush1.bf16.msra.mxu0 0
    %712 = vmatprep.subr.bf16.mxu0 0
    %713 = vmatpush1.bf16.msra.mxu0 0
    %714 = vmatprep.subr.bf16.mxu0 0
    %715 = vmatpush1.bf16.msra.mxu0 0
    %716 = vmatprep.subr.bf16.mxu0 0
    %717 = vmatpush1.bf16.msra.mxu0 0
    %718 = vmatprep.subr.bf16.mxu0 0
    %719 = vmatpush1.bf16.msra.mxu0 0
    %720 = vmatprep.subr.bf16.mxu0 0
    %721 = vmatpush1.bf16.msra.mxu0 0
    %722 = vmatprep.subr.bf16.mxu0 0
    %723 = vmatpush1.bf16.msra.mxu0 0
    %724 = vmatprep.mubr.bf16.mxu0 0
    %725 = vmatmul.mubr.bf16.gmra.mrb[0].mxu0 %v645
    %v726 = vpop.f32.mrb[0].mxu0
    %v727 = vadd.f32 %v617, %v726
    %v728 = vpop.f32.mrb[0].mxu0
    %v729 = vpop.f32.mrb[0].mxu0
    %v730 = vadd.f32 %v617, %v729
    %v731 = vpop.f32.mrb[0].mxu0
    %732 = vmatprep.mubr.bf16.mxu0 0
    %733 = vmatmul.mubr.bf16.gmra.mrb[0].mxu0 %v648
    %v734 = vpop.f32.mrb[0].mxu0
    %v735 = vadd.f32 %v617, %v734
    %v736 = vpop.f32.mrb[0].mxu0
    %v737 = vpop.f32.mrb[0].mxu0
    %v738 = vadd.f32 %v617, %v737
    %v739 = vpop.f32.mrb[0].mxu0
    %740 = vmatprep.mubr.bf16.mxu0 0
    %741 = vmatmul.mubr.bf16.gmra.mrb[0].mxu0 %v651
    %v742 = vpop.f32.mrb[0].mxu0
    %v743 = vadd.f32 %v617, %v742
    %v744 = vpop.f32.mrb[0].mxu0
    %v745 = vpop.f32.mrb[0].mxu0
    %v746 = vadd.f32 %v617, %v745
    %v747 = vpop.f32.mrb[0].mxu0
    %748 = vmatprep.mubr.bf16.mxu0 0
    %749 = vmatmul.mubr.bf16.gmra.mrb[0].mxu0 %v654
    %v750 = vpop.f32.mrb[0].mxu0
    %v751 = vadd.f32 %v617, %v750
    %v752 = vpop.f32.mrb[0].mxu0
    %v753 = vpop.f32.mrb[0].mxu0
    %v754 = vadd.f32 %v617, %v753
    %v755 = vpop.f32.mrb[0].mxu0
    %756 = vmatprep.mubr.bf16.mxu0 0
    %757 = vmatmul.mubr.bf16.gmra.mrb[0].mxu0 %v657
    %v758 = vpop.f32.mrb[0].mxu0
    %v759 = vadd.f32 %v617, %v758
    %v760 = vpop.f32.mrb[0].mxu0
    %v761 = vpop.f32.mrb[0].mxu0
    %v762 = vadd.f32 %v617, %v761
    %v763 = vpop.f32.mrb[0].mxu0
    %764 = vmatprep.mubr.bf16.mxu0 0
    %765 = vmatmul.mubr.bf16.gmra.mrb[0].mxu0 %v660
    %v766 = vpop.f32.mrb[0].mxu0
    %v767 = vadd.f32 %v617, %v766
    %v768 = vpop.f32.mrb[0].mxu0
    %v769 = vpop.f32.mrb[0].mxu0
    %v770 = vadd.f32 %v617, %v769
    %v771 = vpop.f32.mrb[0].mxu0
    %772 = vmatprep.mubr.bf16.mxu0 0
    %773 = vmatmul.mubr.bf16.gmra.mrb[0].mxu0 %v663
    %v774 = vpop.f32.mrb[0].mxu0
    %v775 = vadd.f32 %v617, %v774
    %v776 = vpop.f32.mrb[0].mxu0
    %v777 = vpop.f32.mrb[0].mxu0
    %v778 = vadd.f32 %v617, %v777
    %v779 = vpop.f32.mrb[0].mxu0
    %780 = vmatprep.mubr.bf16.mxu0 0
    %781 = vmatmul.mubr.bf16.gmra.mrb[0].mxu0 %v666
    %v782 = vpop.f32.mrb[0].mxu0
    %v783 = vadd.f32 %v617, %v782
    %v784 = vpop.f32.mrb[0].mxu0
    %v785 = vpop.f32.mrb[0].mxu0
    %v786 = vadd.f32 %v617, %v785
    %v787 = vpop.f32.mrb[0].mxu0
    %788 = vmatprep.mubr.bf16.mxu0 0
    %789 = vmatmul.mubr.bf16.gmra.mrb[0].mxu0 %v669
    %v790 = vpop.f32.mrb[0].mxu0
    %v791 = vadd.f32 %v617, %v790
    %v792 = vpop.f32.mrb[0].mxu0
    %v793 = vpop.f32.mrb[0].mxu0
    %v794 = vadd.f32 %v617, %v793
    %v795 = vpop.f32.mrb[0].mxu0
    %796 = vmatprep.mubr.bf16.mxu0 0
    %797 = vmatmul.mubr.bf16.gmra.mrb[0].mxu0 %v672
    %v798 = vpop.f32.mrb[0].mxu0
    %v799 = vadd.f32 %v617, %v798
    %v800 = vpop.f32.mrb[0].mxu0
    %v801 = vpop.f32.mrb[0].mxu0
    %v802 = vadd.f32 %v617, %v801
    %v803 = vpop.f32.mrb[0].mxu0
    %804 = vmatprep.mubr.bf16.mxu0 0
    %805 = vmatmul.mubr.bf16.gmra.mrb[0].mxu0 %v675
    %v806 = vpop.f32.mrb[0].mxu0
    %v807 = vadd.f32 %v617, %v806
    %v808 = vpop.f32.mrb[0].mxu0
    %v809 = vpop.f32.mrb[0].mxu0
    %v810 = vadd.f32 %v617, %v809
    %v811 = vpop.f32.mrb[0].mxu0
    %812 = vmatprep.mubr.bf16.mxu0 0
    %813 = vmatmul.mubr.bf16.gmra.mrb[0].mxu0 %v678
    %v814 = vpop.f32.mrb[0].mxu0
    %v815 = vadd.f32 %v617, %v814
    %v816 = vpop.f32.mrb[0].mxu0
    %v817 = vpop.f32.mrb[0].mxu0
    %v818 = vadd.f32 %v617, %v817
    %v819 = vpop.f32.mrb[0].mxu0
    %820 = vmatprep.mubr.bf16.mxu0 0
    %821 = vmatmul.mubr.bf16.gmra.mrb[0].mxu0 %v681
    %v822 = vpop.f32.mrb[0].mxu0
    %v823 = vadd.f32 %v617, %v822
    %v824 = vpop.f32.mrb[0].mxu0
    %v825 = vpop.f32.mrb[0].mxu0
    %v826 = vadd.f32 %v617, %v825
    %v827 = vpop.f32.mrb[0].mxu0
    %828 = vmatprep.mubr.bf16.mxu0 0
    %829 = vmatmul.mubr.bf16.gmra.mrb[0].mxu0 %v684
    %v830 = vpop.f32.mrb[0].mxu0
    %v831 = vadd.f32 %v617, %v830
    %v832 = vpop.f32.mrb[0].mxu0
    %v833 = vpop.f32.mrb[0].mxu0
    %v834 = vadd.f32 %v617, %v833
    %v835 = vpop.f32.mrb[0].mxu0
    %836 = vmatprep.mubr.bf16.mxu0 0
    %837 = vmatmul.mubr.bf16.gmra.mrb[0].mxu0 %v687
    %v838 = vpop.f32.mrb[0].mxu0
    %v839 = vadd.f32 %v617, %v838
    %v840 = vpop.f32.mrb[0].mxu0
    %v841 = vpop.f32.mrb[0].mxu0
    %v842 = vadd.f32 %v617, %v841
    %v843 = vpop.f32.mrb[0].mxu0
    %844 = vmatprep.mubr.bf16.mxu0 0
    %845 = vmatmul.mubr.bf16.gmra.mrb[0].mxu0 %v690
    %v846 = vpop.f32.mrb[0].mxu0
    %v847 = vadd.f32 %v617, %v846
    %v848 = vpop.f32.mrb[0].mxu0
    %v849 = vpop.f32.mrb[0].mxu0
    %v850 = vadd.f32 %v617, %v849
    %v851 = vpop.f32.mrb[0].mxu0
    %852 = vdwg.mxu0
    %853 = vst [vmem:[#allocation8] sm:$0xff] %v727
    %854 = vst [vmem:[#allocation8 + $0x8] sm:$0xff] %v730
    %855 = vst [vmem:[#allocation8 + $0x10] sm:$0xff] %v735
    %856 = vst [vmem:[#allocation8 + $0x18] sm:$0xff] %v738
    %857 = vst [vmem:[#allocation8 + $0x20] sm:$0xff] %v743
    %858 = vst [vmem:[#allocation8 + $0x28] sm:$0xff] %v746
    %859 = vst [vmem:[#allocation8 + $0x30] sm:$0xff] %v751
    %860 = vst [vmem:[#allocation8 + $0x38] sm:$0xff] %v754
    %861 = vst [vmem:[#allocation8 + $0x40] sm:$0xff] %v759
    %862 = vst [vmem:[#allocation8 + $0x48] sm:$0xff] %v762
    %863 = vst [vmem:[#allocation8 + $0x50] sm:$0xff] %v767
    %864 = vst [vmem:[#allocation8 + $0x58] sm:$0xff] %v770
    %865 = vst [vmem:[#allocation8 + $0x60] sm:$0xff] %v775
    %866 = vst [vmem:[#allocation8 + $0x68] sm:$0xff] %v778
    %867 = vst [vmem:[#allocation8 + $0x70] sm:$0xff] %v783
    %868 = vst [vmem:[#allocation8 + $0x78] sm:$0xff] %v786
    %869 = vst [vmem:[#allocation8 + $0x80] sm:$0xff] %v791
    %870 = vst [vmem:[#allocation8 + $0x88] sm:$0xff] %v794
    %871 = vst [vmem:[#allocation8 + $0x90] sm:$0xff] %v799
    %872 = vst [vmem:[#allocation8 + $0x98] sm:$0xff] %v802
    %873 = vst [vmem:[#allocation8 + $0xa0] sm:$0xff] %v807
    %874 = vst [vmem:[#allocation8 + $0xa8] sm:$0xff] %v810
    %875 = vst [vmem:[#allocation8 + $0xb0] sm:$0xff] %v815
    %876 = vst [vmem:[#allocation8 + $0xb8] sm:$0xff] %v818
    %877 = vst [vmem:[#allocation8 + $0xc0] sm:$0xff] %v823
    %878 = vst [vmem:[#allocation8 + $0xc8] sm:$0xff] %v826
    %879 = vst [vmem:[#allocation8 + $0xd0] sm:$0xff] %v831
    %880 = vst [vmem:[#allocation8 + $0xd8] sm:$0xff] %v834
    %881 = vst [vmem:[#allocation8 + $0xe0] sm:$0xff] %v839
    %882 = vst [vmem:[#allocation8 + $0xe8] sm:$0xff] %v842
    %883 = vst [vmem:[#allocation8 + $0xf0] sm:$0xff] %v847
    %884 = vst [vmem:[#allocation8 + $0xf8] sm:$0xff] %v850
    %v885 = vld [vmem:[#allocation5] sm:$0xff]
    %v886 = vld [vmem:[#allocation5 + $0x8] sm:$0xff]
    %v887 = vld [vmem:[#allocation5 + $0x10] sm:$0xff]
    %v888 = vld [vmem:[#allocation5 + $0x18] sm:$0xff]
    %v889 = vld [vmem:[#allocation5 + $0x20] sm:$0xff]
    %v890 = vld [vmem:[#allocation5 + $0x28] sm:$0xff]
    %v891 = vld [vmem:[#allocation5 + $0x30] sm:$0xff]
    %v892 = vld [vmem:[#allocation5 + $0x38] sm:$0xff]
    %v893 = vld [vmem:[#allocation5 + $0x40] sm:$0xff]
    %v894 = vld [vmem:[#allocation5 + $0x48] sm:$0xff]
    %v895 = vld [vmem:[#allocation5 + $0x50] sm:$0xff]
    %v896 = vld [vmem:[#allocation5 + $0x58] sm:$0xff]
    %v897 = vld [vmem:[#allocation5 + $0x60] sm:$0xff]
    %v898 = vld [vmem:[#allocation5 + $0x68] sm:$0xff]
    %v899 = vld [vmem:[#allocation5 + $0x70] sm:$0xff]
    %v900 = vld [vmem:[#allocation5 + $0x78] sm:$0xff]
    %v901 = vld [vmem:[#allocation5 + $0x80] sm:$0xff]
    %v902 = vld [vmem:[#allocation5 + $0x88] sm:$0xff]
    %v903 = vld [vmem:[#allocation5 + $0x90] sm:$0xff]
    %v904 = vld [vmem:[#allocation5 + $0x98] sm:$0xff]
    %v905 = vld [vmem:[#allocation5 + $0xa0] sm:$0xff]
    %v906 = vld [vmem:[#allocation5 + $0xa8] sm:$0xff]
    %v907 = vld [vmem:[#allocation5 + $0xb0] sm:$0xff]
    %v908 = vld [vmem:[#allocation5 + $0xb8] sm:$0xff]
    %v909 = vld [vmem:[#allocation5 + $0xc0] sm:$0xff]
    %v910 = vld [vmem:[#allocation5 + $0xc8] sm:$0xff]
    %v911 = vld [vmem:[#allocation5 + $0xd0] sm:$0xff]
    %v912 = vld [vmem:[#allocation5 + $0xd8] sm:$0xff]
    %v913 = vld [vmem:[#allocation5 + $0xe0] sm:$0xff]
    %v914 = vld [vmem:[#allocation5 + $0xe8] sm:$0xff]
    %v915 = vld [vmem:[#allocation5 + $0xf0] sm:$0xff]
    %v916 = vld [vmem:[#allocation5 + $0xf8] sm:$0xff]
    %v917 = vmul.f32 %v727, 0.5
    %v918 = vmul.f32 %v730, 0.5
    %v919 = vmul.f32 %v735, 0.5
    %v920 = vmul.f32 %v738, 0.5
    %v921 = vmul.f32 %v743, 0.5
    %v922 = vmul.f32 %v746, 0.5
    %v923 = vmul.f32 %v751, 0.5
    %v924 = vmul.f32 %v754, 0.5
    %v925 = vmul.f32 %v759, 0.5
    %v926 = vmul.f32 %v762, 0.5
    %v927 = vmul.f32 %v767, 0.5
    %v928 = vmul.f32 %v770, 0.5
    %v929 = vmul.f32 %v775, 0.5
    %v930 = vmul.f32 %v778, 0.5
    %v931 = vmul.f32 %v783, 0.5
    %v932 = vmul.f32 %v786, 0.5
    %v933 = vmul.f32 %v791, 0.5
    %v934 = vmul.f32 %v794, 0.5
    %v935 = vmul.f32 %v799, 0.5
    %v936 = vmul.f32 %v802, 0.5
    %v937 = vmul.f32 %v807, 0.5
    %v938 = vmul.f32 %v810, 0.5
    %v939 = vmul.f32 %v815, 0.5
    %v940 = vmul.f32 %v818, 0.5
    %v941 = vmul.f32 %v823, 0.5
    %v942 = vmul.f32 %v826, 0.5
    %v943 = vmul.f32 %v831, 0.5
    %v944 = vmul.f32 %v834, 0.5
    %v945 = vmul.f32 %v839, 0.5
    %v946 = vmul.f32 %v842, 0.5
    %v947 = vmul.f32 %v847, 0.5
    %v948 = vmul.f32 %v850, 0.5
    %v949 = vmul.f32 %v917, 1.442695
    %v950 = vpow.pop %v949
    %v951 = vmul.f32 %v918, 1.442695
    %v952 = vpow.pop %v951
    %v953 = vmul.f32 %v919, 1.442695
    %v954 = vpow.pop %v953
    %v955 = vmul.f32 %v920, 1.442695
    %v956 = vpow.pop %v955
    %v957 = vmul.f32 %v921, 1.442695
    %v958 = vpow.pop %v957
    %v959 = vmul.f32 %v922, 1.442695
    %v960 = vpow.pop %v959
    %v961 = vmul.f32 %v923, 1.442695
    %v962 = vpow.pop %v961
    %v963 = vmul.f32 %v924, 1.442695
    %v964 = vpow.pop %v963
    %v965 = vmul.f32 %v925, 1.442695
    %v966 = vpow.pop %v965
    %v967 = vmul.f32 %v926, 1.442695
    %v968 = vpow.pop %v967
    %v969 = vmul.f32 %v927, 1.442695
    %v970 = vpow.pop %v969
    %v971 = vmul.f32 %v928, 1.442695
    %v972 = vpow.pop %v971
    %v973 = vmul.f32 %v929, 1.442695
    %v974 = vpow.pop %v973
    %v975 = vmul.f32 %v930, 1.442695
    %v976 = vpow.pop %v975
    %v977 = vmul.f32 %v931, 1.442695
    %v978 = vpow.pop %v977
    %v979 = vmul.f32 %v932, 1.442695
    %v980 = vpow.pop %v979
    %v981 = vmul.f32 %v933, 1.442695
    %v982 = vpow.pop %v981
    %v983 = vmul.f32 %v934, 1.442695
    %v984 = vpow.pop %v983
    %v985 = vmul.f32 %v935, 1.442695
    %v986 = vpow.pop %v985
    %v987 = vmul.f32 %v936, 1.442695
    %v988 = vpow.pop %v987
    %v989 = vmul.f32 %v937, 1.442695
    %v990 = vpow.pop %v989
    %v991 = vmul.f32 %v938, 1.442695
    %v992 = vpow.pop %v991
    %v993 = vmul.f32 %v939, 1.442695
    %v994 = vpow.pop %v993
    %v995 = vmul.f32 %v940, 1.442695
    %v996 = vpow.pop %v995
    %v997 = vmul.f32 %v941, 1.442695
    %v998 = vpow.pop %v997
    %v999 = vmul.f32 %v942, 1.442695
    %v1000 = vpow.pop %v999
    %v1001 = vmul.f32 %v943, 1.442695
    %v1002 = vpow.pop %v1001
    %v1003 = vmul.f32 %v944, 1.442695
    %v1004 = vpow.pop %v1003
    %v1005 = vmul.f32 %v945, 1.442695
    %v1006 = vpow.pop %v1005
    %v1007 = vmul.f32 %v946, 1.442695
    %v1008 = vpow.pop %v1007
    %v1009 = vmul.f32 %v947, 1.442695
    %v1010 = vpow.pop %v1009
    %v1011 = vmul.f32 %v948, 1.442695
    %v1012 = vpow.pop %v1011
    %1045 = vrot.lane.b32.xlu0 %v950, 96
    %v1046 = vpop.permute.xlu0 %1045
    %1047 = vrot.lane.b32.xlu0 %v952, 96
    %v1048 = vpop.permute.xlu0 %1047
    %1049 = vrot.lane.b32.xlu0 %v954, 96
    %v1050 = vpop.permute.xlu0 %1049
    %1051 = vrot.lane.b32.xlu0 %v956, 96
    %v1052 = vpop.permute.xlu0 %1051
    %1053 = vrot.lane.b32.xlu0 %v958, 96
    %v1054 = vpop.permute.xlu0 %1053
    %1055 = vrot.lane.b32.xlu0 %v960, 96
    %v1056 = vpop.permute.xlu0 %1055
    %1057 = vrot.lane.b32.xlu0 %v962, 96
    %v1058 = vpop.permute.xlu0 %1057
    %1059 = vrot.lane.b32.xlu0 %v964, 96
    %v1060 = vpop.permute.xlu0 %1059
    %1061 = vrot.lane.b32.xlu0 %v966, 96
    %v1062 = vpop.permute.xlu0 %1061
    %1063 = vrot.lane.b32.xlu0 %v968, 96
    %v1064 = vpop.permute.xlu0 %1063
    %1065 = vrot.lane.b32.xlu0 %v970, 96
    %v1066 = vpop.permute.xlu0 %1065
    %1067 = vrot.lane.b32.xlu0 %v972, 96
    %v1068 = vpop.permute.xlu0 %1067
    %1069 = vrot.lane.b32.xlu0 %v974, 96
    %v1070 = vpop.permute.xlu0 %1069
    %1071 = vrot.lane.b32.xlu0 %v976, 96
    %v1072 = vpop.permute.xlu0 %1071
    %1073 = vrot.lane.b32.xlu0 %v978, 96
    %v1074 = vpop.permute.xlu0 %1073
    %1075 = vrot.lane.b32.xlu0 %v980, 96
    %v1076 = vpop.permute.xlu0 %1075
    %1077 = vrot.lane.b32.xlu0 %v982, 96
    %v1078 = vpop.permute.xlu0 %1077
    %1079 = vrot.lane.b32.xlu0 %v984, 96
    %v1080 = vpop.permute.xlu0 %1079
    %1081 = vrot.lane.b32.xlu0 %v986, 96
    %v1082 = vpop.permute.xlu0 %1081
    %1083 = vrot.lane.b32.xlu0 %v988, 96
    %v1084 = vpop.permute.xlu0 %1083
    %1085 = vrot.lane.b32.xlu0 %v990, 96
    %v1086 = vpop.permute.xlu0 %1085
    %1087 = vrot.lane.b32.xlu0 %v992, 96
    %v1088 = vpop.permute.xlu0 %1087
    %1089 = vrot.lane.b32.xlu0 %v994, 96
    %v1090 = vpop.permute.xlu0 %1089
    %1091 = vrot.lane.b32.xlu0 %v996, 96
    %v1092 = vpop.permute.xlu0 %1091
    %1093 = vrot.lane.b32.xlu0 %v998, 96
    %v1094 = vpop.permute.xlu0 %1093
    %1095 = vrot.lane.b32.xlu0 %v1000, 96
    %v1096 = vpop.permute.xlu0 %1095
    %1097 = vrot.lane.b32.xlu0 %v1002, 96
    %v1098 = vpop.permute.xlu0 %1097
    %1099 = vrot.lane.b32.xlu0 %v1004, 96
    %v1100 = vpop.permute.xlu0 %1099
    %1101 = vrot.lane.b32.xlu0 %v1006, 96
    %v1102 = vpop.permute.xlu0 %1101
    %1103 = vrot.lane.b32.xlu0 %v1008, 96
    %v1104 = vpop.permute.xlu0 %1103
    %1105 = vrot.lane.b32.xlu0 %v1010, 96
    %v1106 = vpop.permute.xlu0 %1105
    %1107 = vrot.lane.b32.xlu0 %v1012, 96
    %v1108 = vpop.permute.xlu0 %1107
    %v1141 = vmul.f32 %v885, %v1046
    %v1142 = vmul.f32 %v886, %v1048
    %v1143 = vmul.f32 %v887, %v1050
    %v1144 = vmul.f32 %v888, %v1052
    %v1145 = vmul.f32 %v889, %v1054
    %v1146 = vmul.f32 %v890, %v1056
    %v1147 = vmul.f32 %v891, %v1058
    %v1148 = vmul.f32 %v892, %v1060
    %v1149 = vmul.f32 %v893, %v1062
    %v1150 = vmul.f32 %v894, %v1064
    %v1151 = vmul.f32 %v895, %v1066
    %v1152 = vmul.f32 %v896, %v1068
    %v1153 = vmul.f32 %v897, %v1070
    %v1154 = vmul.f32 %v898, %v1072
    %v1155 = vmul.f32 %v899, %v1074
    %v1156 = vmul.f32 %v900, %v1076
    %v1157 = vmul.f32 %v901, %v1078
    %v1158 = vmul.f32 %v902, %v1080
    %v1159 = vmul.f32 %v903, %v1082
    %v1160 = vmul.f32 %v904, %v1084
    %v1161 = vmul.f32 %v905, %v1086
    %v1162 = vmul.f32 %v906, %v1088
    %v1163 = vmul.f32 %v907, %v1090
    %v1164 = vmul.f32 %v908, %v1092
    %v1165 = vmul.f32 %v909, %v1094
    %v1166 = vmul.f32 %v910, %v1096
    %v1167 = vmul.f32 %v911, %v1098
    %v1168 = vmul.f32 %v912, %v1100
    %v1169 = vmul.f32 %v913, %v1102
    %v1170 = vmul.f32 %v914, %v1104
    %v1171 = vmul.f32 %v915, %v1106
    %v1172 = vmul.f32 %v916, %v1108
    %v1173 = vadd.f32 %v727, %v1141
    %v1174 = vadd.f32 %v730, %v1142
    %v1175 = vadd.f32 %v735, %v1143
    %v1176 = vadd.f32 %v738, %v1144
    %v1177 = vadd.f32 %v743, %v1145
    %v1178 = vadd.f32 %v746, %v1146
    %v1179 = vadd.f32 %v751, %v1147
    %v1180 = vadd.f32 %v754, %v1148
    %v1181 = vadd.f32 %v759, %v1149
    %v1182 = vadd.f32 %v762, %v1150
    %v1183 = vadd.f32 %v767, %v1151
    %v1184 = vadd.f32 %v770, %v1152
    %v1185 = vadd.f32 %v775, %v1153
    %v1186 = vadd.f32 %v778, %v1154
    %v1187 = vadd.f32 %v783, %v1155
    %v1188 = vadd.f32 %v786, %v1156
    %v1189 = vadd.f32 %v791, %v1157
    %v1190 = vadd.f32 %v794, %v1158
    %v1191 = vadd.f32 %v799, %v1159
    %v1192 = vadd.f32 %v802, %v1160
    %v1193 = vadd.f32 %v807, %v1161
    %v1194 = vadd.f32 %v810, %v1162
    %v1195 = vadd.f32 %v815, %v1163
    %v1196 = vadd.f32 %v818, %v1164
    %v1197 = vadd.f32 %v823, %v1165
    %v1198 = vadd.f32 %v826, %v1166
    %v1199 = vadd.f32 %v831, %v1167
    %v1200 = vadd.f32 %v834, %v1168
    %v1201 = vadd.f32 %v839, %v1169
    %v1202 = vadd.f32 %v842, %v1170
    %v1203 = vadd.f32 %v847, %v1171
    %v1204 = vadd.f32 %v850, %v1172
    %v1205 = vpack.c.bf16 %v1174, %v1173
    %v1206 = vpack.c.bf16 %v1176, %v1175
    %v1207 = vpack.c.bf16 %v1178, %v1177
    %v1208 = vpack.c.bf16 %v1180, %v1179
    %v1209 = vpack.c.bf16 %v1182, %v1181
    %v1210 = vpack.c.bf16 %v1184, %v1183
    %v1211 = vpack.c.bf16 %v1186, %v1185
    %v1212 = vpack.c.bf16 %v1188, %v1187
    %v1213 = vpack.c.bf16 %v1190, %v1189
    %v1214 = vpack.c.bf16 %v1192, %v1191
    %v1215 = vpack.c.bf16 %v1194, %v1193
    %v1216 = vpack.c.bf16 %v1196, %v1195
    %v1217 = vpack.c.bf16 %v1198, %v1197
    %v1218 = vpack.c.bf16 %v1200, %v1199
    %v1219 = vpack.c.bf16 %v1202, %v1201
    %v1220 = vpack.c.bf16 %v1204, %v1203
    %v1221 = vld [vmem:[%s6] sm:$0xf]
    %v1222 = vld [vmem:[%s6 + $0x4] sm:$0xf]
    %v1223 = vld [vmem:[%s6 + $0x8] sm:$0xf]
    %v1224 = vld [vmem:[%s6 + $0xc] sm:$0xf]
    %v1225 = vld [vmem:[%s7] sm:$0x1]
    %v1227 = vlaneseq
    %v1228 = vshrl.u32 %v1227, 7
    %v1229 = vsub.s32 0, %v1228
    %v1230 = vrot.slane %v1225, %v1229
    %v1236 = vunpack.c.l.b16 %v1221
    %v1237 = vunpack.c.l.b16 %v1222
    %v1238 = vunpack.c.l.b16 %v1223
    %v1239 = vunpack.c.l.b16 %v1224
    %v1240 = vpack.c.b16 %v1237, %v1236
    %v1241 = vpack.c.b16 %v1239, %v1238
    %vm1244 = vcmask 261120
    %v1246 = vsel %vm1244, %v1205, 0
    %v1249 = vsel %vm1244, %v1206, 0
    %v1252 = vsel %vm1244, %v1207, 0
    %v1255 = vsel %vm1244, %v1208, 0
    %v1258 = vsel %vm1244, %v1209, 0
    %v1261 = vsel %vm1244, %v1210, 0
    %v1264 = vsel %vm1244, %v1211, 0
    %v1267 = vsel %vm1244, %v1212, 0
    %v1270 = vsel %vm1244, %v1213, 0
    %v1273 = vsel %vm1244, %v1214, 0
    %v1276 = vsel %vm1244, %v1215, 0
    %v1279 = vsel %vm1244, %v1216, 0
    %v1282 = vsel %vm1244, %v1217, 0
    %v1285 = vsel %vm1244, %v1218, 0
    %v1288 = vsel %vm1244, %v1219, 0
    %v1291 = vsel %vm1244, %v1220, 0
    %1293 = vmatprep.subr.bf16.mxu0 0
    %1294 = vmatpush1.bf16.msra.mxu0 %v1240
    %1295 = vmatprep.subr.bf16.mxu0 0
    %1296 = vmatpush1.bf16.msra.mxu0 %v1241
    %1297 = vmatprep.subr.bf16.mxu0 0
    %1298 = vmatpush1.bf16.msra.mxu0 0
    %1299 = vmatprep.subr.bf16.mxu0 0
    %1300 = vmatpush1.bf16.msra.mxu0 0
    %1301 = vmatprep.subr.bf16.mxu0 0
    %1302 = vmatpush1.bf16.msra.mxu0 0
    %1303 = vmatprep.subr.bf16.mxu0 0
    %1304 = vmatpush1.bf16.msra.mxu0 0
    %1305 = vmatprep.subr.bf16.mxu0 0
    %1306 = vmatpush1.bf16.msra.mxu0 0
    %1307 = vmatprep.subr.bf16.mxu0 0
    %1308 = vmatpush1.bf16.msra.mxu0 0
    %1309 = vmatprep.subr.bf16.mxu0 0
    %1310 = vmatpush1.bf16.msra.mxu0 0
    %1311 = vmatprep.subr.bf16.mxu0 0
    %1312 = vmatpush1.bf16.msra.mxu0 0
    %1313 = vmatprep.subr.bf16.mxu0 0
    %1314 = vmatpush1.bf16.msra.mxu0 0
    %1315 = vmatprep.subr.bf16.mxu0 0
    %1316 = vmatpush1.bf16.msra.mxu0 0
    %1317 = vmatprep.subr.bf16.mxu0 0
    %1318 = vmatpush1.bf16.msra.mxu0 0
    %1319 = vmatprep.subr.bf16.mxu0 0
    %1320 = vmatpush1.bf16.msra.mxu0 0
    %1321 = vmatprep.subr.bf16.mxu0 0
    %1322 = vmatpush1.bf16.msra.mxu0 0
    %1323 = vmatprep.subr.bf16.mxu0 0
    %1324 = vmatpush1.bf16.msra.mxu0 0
    %1325 = vmatprep.mubr.bf16.mxu0 0
    %1326 = vmatmul.mubr.bf16.gmra.mrb[0].mxu0 %v1246
    %v1327 = vpop.f32.mrb[0].mxu0
    %v1328 = vadd.f32 %v1230, %v1327
    %v1329 = vpop.f32.mrb[0].mxu0
    %v1330 = vpop.f32.mrb[0].mxu0
    %v1331 = vadd.f32 %v1230, %v1330
    %v1332 = vpop.f32.mrb[0].mxu0
    %1333 = vmatprep.mubr.bf16.mxu0 0
    %1334 = vmatmul.mubr.bf16.gmra.mrb[0].mxu0 %v1249
    %v1335 = vpop.f32.mrb[0].mxu0
    %v1336 = vadd.f32 %v1230, %v1335
    %v1337 = vpop.f32.mrb[0].mxu0
    %v1338 = vpop.f32.mrb[0].mxu0
    %v1339 = vadd.f32 %v1230, %v1338
    %v1340 = vpop.f32.mrb[0].mxu0
    %1341 = vmatprep.mubr.bf16.mxu0 0
    %1342 = vmatmul.mubr.bf16.gmra.mrb[0].mxu0 %v1252
    %v1343 = vpop.f32.mrb[0].mxu0
    %v1344 = vadd.f32 %v1230, %v1343
    %v1345 = vpop.f32.mrb[0].mxu0
    %v1346 = vpop.f32.mrb[0].mxu0
    %v1347 = vadd.f32 %v1230, %v1346
    %v1348 = vpop.f32.mrb[0].mxu0
    %1349 = vmatprep.mubr.bf16.mxu0 0
    %1350 = vmatmul.mubr.bf16.gmra.mrb[0].mxu0 %v1255
    %v1351 = vpop.f32.mrb[0].mxu0
    %v1352 = vadd.f32 %v1230, %v1351
    %v1353 = vpop.f32.mrb[0].mxu0
    %v1354 = vpop.f32.mrb[0].mxu0
    %v1355 = vadd.f32 %v1230, %v1354
    %v1356 = vpop.f32.mrb[0].mxu0
    %1357 = vmatprep.mubr.bf16.mxu0 0
    %1358 = vmatmul.mubr.bf16.gmra.mrb[0].mxu0 %v1258
    %v1359 = vpop.f32.mrb[0].mxu0
    %v1360 = vadd.f32 %v1230, %v1359
    %v1361 = vpop.f32.mrb[0].mxu0
    %v1362 = vpop.f32.mrb[0].mxu0
    %v1363 = vadd.f32 %v1230, %v1362
    %v1364 = vpop.f32.mrb[0].mxu0
    %1365 = vmatprep.mubr.bf16.mxu0 0
    %1366 = vmatmul.mubr.bf16.gmra.mrb[0].mxu0 %v1261
    %v1367 = vpop.f32.mrb[0].mxu0
    %v1368 = vadd.f32 %v1230, %v1367
    %v1369 = vpop.f32.mrb[0].mxu0
    %v1370 = vpop.f32.mrb[0].mxu0
    %v1371 = vadd.f32 %v1230, %v1370
    %v1372 = vpop.f32.mrb[0].mxu0
    %1373 = vmatprep.mubr.bf16.mxu0 0
    %1374 = vmatmul.mubr.bf16.gmra.mrb[0].mxu0 %v1264
    %v1375 = vpop.f32.mrb[0].mxu0
    %v1376 = vadd.f32 %v1230, %v1375
    %v1377 = vpop.f32.mrb[0].mxu0
    %v1378 = vpop.f32.mrb[0].mxu0
    %v1379 = vadd.f32 %v1230, %v1378
    %v1380 = vpop.f32.mrb[0].mxu0
    %1381 = vmatprep.mubr.bf16.mxu0 0
    %1382 = vmatmul.mubr.bf16.gmra.mrb[0].mxu0 %v1267
    %v1383 = vpop.f32.mrb[0].mxu0
    %v1384 = vadd.f32 %v1230, %v1383
    %v1385 = vpop.f32.mrb[0].mxu0
    %v1386 = vpop.f32.mrb[0].mxu0
    %v1387 = vadd.f32 %v1230, %v1386
    %v1388 = vpop.f32.mrb[0].mxu0
    %1389 = vmatprep.mubr.bf16.mxu0 0
    %1390 = vmatmul.mubr.bf16.gmra.mrb[0].mxu0 %v1270
    %v1391 = vpop.f32.mrb[0].mxu0
    %v1392 = vadd.f32 %v1230, %v1391
    %v1393 = vpop.f32.mrb[0].mxu0
    %v1394 = vpop.f32.mrb[0].mxu0
    %v1395 = vadd.f32 %v1230, %v1394
    %v1396 = vpop.f32.mrb[0].mxu0
    %1397 = vmatprep.mubr.bf16.mxu0 0
    %1398 = vmatmul.mubr.bf16.gmra.mrb[0].mxu0 %v1273
    %v1399 = vpop.f32.mrb[0].mxu0
    %v1400 = vadd.f32 %v1230, %v1399
    %v1401 = vpop.f32.mrb[0].mxu0
    %v1402 = vpop.f32.mrb[0].mxu0
    %v1403 = vadd.f32 %v1230, %v1402
    %v1404 = vpop.f32.mrb[0].mxu0
    %1405 = vmatprep.mubr.bf16.mxu0 0
    %1406 = vmatmul.mubr.bf16.gmra.mrb[0].mxu0 %v1276
    %v1407 = vpop.f32.mrb[0].mxu0
    %v1408 = vadd.f32 %v1230, %v1407
    %v1409 = vpop.f32.mrb[0].mxu0
    %v1410 = vpop.f32.mrb[0].mxu0
    %v1411 = vadd.f32 %v1230, %v1410
    %v1412 = vpop.f32.mrb[0].mxu0
    %1413 = vmatprep.mubr.bf16.mxu0 0
    %1414 = vmatmul.mubr.bf16.gmra.mrb[0].mxu0 %v1279
    %v1415 = vpop.f32.mrb[0].mxu0
    %v1416 = vadd.f32 %v1230, %v1415
    %v1417 = vpop.f32.mrb[0].mxu0
    %v1418 = vpop.f32.mrb[0].mxu0
    %v1419 = vadd.f32 %v1230, %v1418
    %v1420 = vpop.f32.mrb[0].mxu0
    %1421 = vmatprep.mubr.bf16.mxu0 0
    %1422 = vmatmul.mubr.bf16.gmra.mrb[0].mxu0 %v1282
    %v1423 = vpop.f32.mrb[0].mxu0
    %v1424 = vadd.f32 %v1230, %v1423
    %v1425 = vpop.f32.mrb[0].mxu0
    %v1426 = vpop.f32.mrb[0].mxu0
    %v1427 = vadd.f32 %v1230, %v1426
    %v1428 = vpop.f32.mrb[0].mxu0
    %1429 = vmatprep.mubr.bf16.mxu0 0
    %1430 = vmatmul.mubr.bf16.gmra.mrb[0].mxu0 %v1285
    %v1431 = vpop.f32.mrb[0].mxu0
    %v1432 = vadd.f32 %v1230, %v1431
    %v1433 = vpop.f32.mrb[0].mxu0
    %v1434 = vpop.f32.mrb[0].mxu0
    %v1435 = vadd.f32 %v1230, %v1434
    %v1436 = vpop.f32.mrb[0].mxu0
    %1437 = vmatprep.mubr.bf16.mxu0 0
    %1438 = vmatmul.mubr.bf16.gmra.mrb[0].mxu0 %v1288
    %v1439 = vpop.f32.mrb[0].mxu0
    %v1440 = vadd.f32 %v1230, %v1439
    %v1441 = vpop.f32.mrb[0].mxu0
    %v1442 = vpop.f32.mrb[0].mxu0
    %v1443 = vadd.f32 %v1230, %v1442
    %v1444 = vpop.f32.mrb[0].mxu0
    %1445 = vmatprep.mubr.bf16.mxu0 0
    %1446 = vmatmul.mubr.bf16.gmra.mrb[0].mxu0 %v1291
    %v1447 = vpop.f32.mrb[0].mxu0
    %v1448 = vadd.f32 %v1230, %v1447
    %v1449 = vpop.f32.mrb[0].mxu0
    %v1450 = vpop.f32.mrb[0].mxu0
    %v1451 = vadd.f32 %v1230, %v1450
    %v1452 = vpop.f32.mrb[0].mxu0
    %1453 = vdwg.mxu0
    %v1454 = vpack.c.bf16 %v1331, %v1328
    %v1455 = vpack.c.bf16 %v1339, %v1336
    %v1456 = vpack.c.bf16 %v1347, %v1344
    %v1457 = vpack.c.bf16 %v1355, %v1352
    %v1458 = vpack.c.bf16 %v1363, %v1360
    %v1459 = vpack.c.bf16 %v1371, %v1368
    %v1460 = vpack.c.bf16 %v1379, %v1376
    %v1461 = vpack.c.bf16 %v1387, %v1384
    %v1462 = vpack.c.bf16 %v1395, %v1392
    %v1463 = vpack.c.bf16 %v1403, %v1400
    %v1464 = vpack.c.bf16 %v1411, %v1408
    %v1465 = vpack.c.bf16 %v1419, %v1416
    %v1466 = vpack.c.bf16 %v1427, %v1424
    %v1467 = vpack.c.bf16 %v1435, %v1432
    %v1468 = vpack.c.bf16 %v1443, %v1440
    %v1469 = vpack.c.bf16 %v1451, %v1448
    %v1470 = vld [vmem:[%s8] sm:$0xff]
    %v1471 = vld [vmem:[%s8 + $0x8] sm:$0xff]
    %v1472 = vld [vmem:[%s8 + $0x10] sm:$0xff]
    %v1473 = vld [vmem:[%s8 + $0x18] sm:$0xff]
    %v1474 = vld [vmem:[%s8 + $0x20] sm:$0xff]
    %v1475 = vld [vmem:[%s8 + $0x28] sm:$0xff]
    %v1476 = vld [vmem:[%s8 + $0x30] sm:$0xff]
    %v1477 = vld [vmem:[%s8 + $0x38] sm:$0xff]
    %v1478 = vld [vmem:[%s9] sm:$0x3]
    %v1480 = vlaneseq
    %v1481 = vshrl.u32 %v1480, 7
    %v1482 = vsub.s32 0, %v1481
    %v1483 = vrot.slane %v1478, %v1482
    %v1484 = vlaneseq
    %v1485 = vshrl.u32 %v1484, 7
    %v1486 = vsub.s32 1, %v1485
    %v1487 = vrot.slane %v1478, %v1486
    %v1498 = vunpack.c.l.b16 %v1470
    %v1499 = vunpack.c.h.b16 %v1470
    %v1500 = vunpack.c.l.b16 %v1471
    %v1501 = vunpack.c.h.b16 %v1471
    %v1502 = vunpack.c.l.b16 %v1472
    %v1503 = vunpack.c.h.b16 %v1472
    %v1504 = vunpack.c.l.b16 %v1473
    %v1505 = vunpack.c.h.b16 %v1473
    %v1506 = vunpack.c.l.b16 %v1474
    %v1507 = vunpack.c.h.b16 %v1474
    %v1508 = vunpack.c.l.b16 %v1475
    %v1509 = vunpack.c.h.b16 %v1475
    %v1510 = vunpack.c.l.b16 %v1476
    %v1511 = vunpack.c.h.b16 %v1476
    %v1512 = vunpack.c.l.b16 %v1477
    %v1513 = vunpack.c.h.b16 %v1477
    %v1514 = vpack.c.b16 %v1500, %v1498
    %v1515 = vpack.c.b16 %v1501, %v1499
    %v1516 = vpack.c.b16 %v1504, %v1502
    %v1517 = vpack.c.b16 %v1505, %v1503
    %v1518 = vpack.c.b16 %v1508, %v1506
    %v1519 = vpack.c.b16 %v1509, %v1507
    %v1520 = vpack.c.b16 %v1512, %v1510
    %v1521 = vpack.c.b16 %v1513, %v1511
    %v1531 = vsel %vm643, %v1454, 0
    %v1534 = vsel %vm643, %v1455, 0
    %v1537 = vsel %vm643, %v1456, 0
    %v1540 = vsel %vm643, %v1457, 0
    %v1543 = vsel %vm643, %v1458, 0
    %v1546 = vsel %vm643, %v1459, 0
    %v1549 = vsel %vm643, %v1460, 0
    %v1552 = vsel %vm643, %v1461, 0
    %v1555 = vsel %vm643, %v1462, 0
    %v1558 = vsel %vm643, %v1463, 0
    %v1561 = vsel %vm643, %v1464, 0
    %v1564 = vsel %vm643, %v1465, 0
    %v1567 = vsel %vm643, %v1466, 0
    %v1570 = vsel %vm643, %v1467, 0
    %v1573 = vsel %vm643, %v1468, 0
    %v1576 = vsel %vm643, %v1469, 0
    %1578 = vmatprep.subr.bf16.mxu0 %v1515
    %1579 = vmatpush1.bf16.msra.mxu0 %v1514
    %1580 = vmatprep.subr.bf16.mxu0 %v1517
    %1581 = vmatpush1.bf16.msra.mxu0 %v1516
    %1582 = vmatprep.subr.bf16.mxu0 %v1519
    %1583 = vmatpush1.bf16.msra.mxu0 %v1518
    %1584 = vmatprep.subr.bf16.mxu0 %v1521
    %1585 = vmatpush1.bf16.msra.mxu0 %v1520
    %1586 = vmatprep.subr.bf16.mxu0 0
    %1587 = vmatpush1.bf16.msra.mxu0 0
    %1588 = vmatprep.subr.bf16.mxu0 0
    %1589 = vmatpush1.bf16.msra.mxu0 0
    %1590 = vmatprep.subr.bf16.mxu0 0
    %1591 = vmatpush1.bf16.msra.mxu0 0
    %1592 = vmatprep.subr.bf16.mxu0 0
    %1593 = vmatpush1.bf16.msra.mxu0 0
    %1594 = vmatprep.subr.bf16.mxu0 0
    %1595 = vmatpush1.bf16.msra.mxu0 0
    %1596 = vmatprep.subr.bf16.mxu0 0
    %1597 = vmatpush1.bf16.msra.mxu0 0
    %1598 = vmatprep.subr.bf16.mxu0 0
    %1599 = vmatpush1.bf16.msra.mxu0 0
    %1600 = vmatprep.subr.bf16.mxu0 0
    %1601 = vmatpush1.bf16.msra.mxu0 0
    %1602 = vmatprep.subr.bf16.mxu0 0
    %1603 = vmatpush1.bf16.msra.mxu0 0
    %1604 = vmatprep.subr.bf16.mxu0 0
    %1605 = vmatpush1.bf16.msra.mxu0 0
    %1606 = vmatprep.subr.bf16.mxu0 0
    %1607 = vmatpush1.bf16.msra.mxu0 0
    %1608 = vmatprep.subr.bf16.mxu0 0
    %1609 = vmatpush1.bf16.msra.mxu0 0
    %1610 = vmatprep.mubr.bf16.mxu0 0
    %1611 = vmatmul.mubr.bf16.gmra.mrb[0].mxu0 %v1531
    %v1612 = vpop.f32.mrb[0].mxu0
    %v1613 = vadd.f32 %v1483, %v1612
    %v1614 = vpop.f32.mrb[0].mxu0
    %v1615 = vadd.f32 %v1487, %v1614
    %v1616 = vpop.f32.mrb[0].mxu0
    %v1617 = vadd.f32 %v1483, %v1616
    %v1618 = vpop.f32.mrb[0].mxu0
    %v1619 = vadd.f32 %v1487, %v1618
    %1620 = vmatprep.mubr.bf16.mxu0 0
    %1621 = vmatmul.mubr.bf16.gmra.mrb[0].mxu0 %v1534
    %v1622 = vpop.f32.mrb[0].mxu0
    %v1623 = vadd.f32 %v1483, %v1622
    %v1624 = vpop.f32.mrb[0].mxu0
    %v1625 = vadd.f32 %v1487, %v1624
    %v1626 = vpop.f32.mrb[0].mxu0
    %v1627 = vadd.f32 %v1483, %v1626
    %v1628 = vpop.f32.mrb[0].mxu0
    %v1629 = vadd.f32 %v1487, %v1628
    %1630 = vmatprep.mubr.bf16.mxu0 0
    %1631 = vmatmul.mubr.bf16.gmra.mrb[0].mxu0 %v1537
    %v1632 = vpop.f32.mrb[0].mxu0
    %v1633 = vadd.f32 %v1483, %v1632
    %v1634 = vpop.f32.mrb[0].mxu0
    %v1635 = vadd.f32 %v1487, %v1634
    %v1636 = vpop.f32.mrb[0].mxu0
    %v1637 = vadd.f32 %v1483, %v1636
    %v1638 = vpop.f32.mrb[0].mxu0
    %v1639 = vadd.f32 %v1487, %v1638
    %1640 = vmatprep.mubr.bf16.mxu0 0
    %1641 = vmatmul.mubr.bf16.gmra.mrb[0].mxu0 %v1540
    %v1642 = vpop.f32.mrb[0].mxu0
    %v1643 = vadd.f32 %v1483, %v1642
    %v1644 = vpop.f32.mrb[0].mxu0
    %v1645 = vadd.f32 %v1487, %v1644
    %v1646 = vpop.f32.mrb[0].mxu0
    %v1647 = vadd.f32 %v1483, %v1646
    %v1648 = vpop.f32.mrb[0].mxu0
    %v1649 = vadd.f32 %v1487, %v1648
    %1650 = vmatprep.mubr.bf16.mxu0 0
    %1651 = vmatmul.mubr.bf16.gmra.mrb[0].mxu0 %v1543
    %v1652 = vpop.f32.mrb[0].mxu0
    %v1653 = vadd.f32 %v1483, %v1652
    %v1654 = vpop.f32.mrb[0].mxu0
    %v1655 = vadd.f32 %v1487, %v1654
    %v1656 = vpop.f32.mrb[0].mxu0
    %v1657 = vadd.f32 %v1483, %v1656
    %v1658 = vpop.f32.mrb[0].mxu0
    %v1659 = vadd.f32 %v1487, %v1658
    %1660 = vmatprep.mubr.bf16.mxu0 0
    %1661 = vmatmul.mubr.bf16.gmra.mrb[0].mxu0 %v1546
    %v1662 = vpop.f32.mrb[0].mxu0
    %v1663 = vadd.f32 %v1483, %v1662
    %v1664 = vpop.f32.mrb[0].mxu0
    %v1665 = vadd.f32 %v1487, %v1664
    %v1666 = vpop.f32.mrb[0].mxu0
    %v1667 = vadd.f32 %v1483, %v1666
    %v1668 = vpop.f32.mrb[0].mxu0
    %v1669 = vadd.f32 %v1487, %v1668
    %1670 = vmatprep.mubr.bf16.mxu0 0
    %1671 = vmatmul.mubr.bf16.gmra.mrb[0].mxu0 %v1549
    %v1672 = vpop.f32.mrb[0].mxu0
    %v1673 = vadd.f32 %v1483, %v1672
    %v1674 = vpop.f32.mrb[0].mxu0
    %v1675 = vadd.f32 %v1487, %v1674
    %v1676 = vpop.f32.mrb[0].mxu0
    %v1677 = vadd.f32 %v1483, %v1676
    %v1678 = vpop.f32.mrb[0].mxu0
    %v1679 = vadd.f32 %v1487, %v1678
    %1680 = vmatprep.mubr.bf16.mxu0 0
    %1681 = vmatmul.mubr.bf16.gmra.mrb[0].mxu0 %v1552
    %v1682 = vpop.f32.mrb[0].mxu0
    %v1683 = vadd.f32 %v1483, %v1682
    %v1684 = vpop.f32.mrb[0].mxu0
    %v1685 = vadd.f32 %v1487, %v1684
    %v1686 = vpop.f32.mrb[0].mxu0
    %v1687 = vadd.f32 %v1483, %v1686
    %v1688 = vpop.f32.mrb[0].mxu0
    %v1689 = vadd.f32 %v1487, %v1688
    %1690 = vmatprep.mubr.bf16.mxu0 0
    %1691 = vmatmul.mubr.bf16.gmra.mrb[0].mxu0 %v1555
    %v1692 = vpop.f32.mrb[0].mxu0
    %v1693 = vadd.f32 %v1483, %v1692
    %v1694 = vpop.f32.mrb[0].mxu0
    %v1695 = vadd.f32 %v1487, %v1694
    %v1696 = vpop.f32.mrb[0].mxu0
    %v1697 = vadd.f32 %v1483, %v1696
    %v1698 = vpop.f32.mrb[0].mxu0
    %v1699 = vadd.f32 %v1487, %v1698
    %1700 = vmatprep.mubr.bf16.mxu0 0
    %1701 = vmatmul.mubr.bf16.gmra.mrb[0].mxu0 %v1558
    %v1702 = vpop.f32.mrb[0].mxu0
    %v1703 = vadd.f32 %v1483, %v1702
    %v1704 = vpop.f32.mrb[0].mxu0
    %v1705 = vadd.f32 %v1487, %v1704
    %v1706 = vpop.f32.mrb[0].mxu0
    %v1707 = vadd.f32 %v1483, %v1706
    %v1708 = vpop.f32.mrb[0].mxu0
    %v1709 = vadd.f32 %v1487, %v1708
    %1710 = vmatprep.mubr.bf16.mxu0 0
    %1711 = vmatmul.mubr.bf16.gmra.mrb[0].mxu0 %v1561
    %v1712 = vpop.f32.mrb[0].mxu0
    %v1713 = vadd.f32 %v1483, %v1712
    %v1714 = vpop.f32.mrb[0].mxu0
    %v1715 = vadd.f32 %v1487, %v1714
    %v1716 = vpop.f32.mrb[0].mxu0
    %v1717 = vadd.f32 %v1483, %v1716
    %v1718 = vpop.f32.mrb[0].mxu0
    %v1719 = vadd.f32 %v1487, %v1718
    %1720 = vmatprep.mubr.bf16.mxu0 0
    %1721 = vmatmul.mubr.bf16.gmra.mrb[0].mxu0 %v1564
    %v1722 = vpop.f32.mrb[0].mxu0
    %v1723 = vadd.f32 %v1483, %v1722
    %v1724 = vpop.f32.mrb[0].mxu0
    %v1725 = vadd.f32 %v1487, %v1724
    %v1726 = vpop.f32.mrb[0].mxu0
    %v1727 = vadd.f32 %v1483, %v1726
    %v1728 = vpop.f32.mrb[0].mxu0
    %v1729 = vadd.f32 %v1487, %v1728
    %1730 = vmatprep.mubr.bf16.mxu0 0
    %1731 = vmatmul.mubr.bf16.gmra.mrb[0].mxu0 %v1567
    %v1732 = vpop.f32.mrb[0].mxu0
    %v1733 = vadd.f32 %v1483, %v1732
    %v1734 = vpop.f32.mrb[0].mxu0
    %v1735 = vadd.f32 %v1487, %v1734
    %v1736 = vpop.f32.mrb[0].mxu0
    %v1737 = vadd.f32 %v1483, %v1736
    %v1738 = vpop.f32.mrb[0].mxu0
    %v1739 = vadd.f32 %v1487, %v1738
    %1740 = vmatprep.mubr.bf16.mxu0 0
    %1741 = vmatmul.mubr.bf16.gmra.mrb[0].mxu0 %v1570
    %v1742 = vpop.f32.mrb[0].mxu0
    %v1743 = vadd.f32 %v1483, %v1742
    %v1744 = vpop.f32.mrb[0].mxu0
    %v1745 = vadd.f32 %v1487, %v1744
    %v1746 = vpop.f32.mrb[0].mxu0
    %v1747 = vadd.f32 %v1483, %v1746
    %v1748 = vpop.f32.mrb[0].mxu0
    %v1749 = vadd.f32 %v1487, %v1748
    %1750 = vmatprep.mubr.bf16.mxu0 0
    %1751 = vmatmul.mubr.bf16.gmra.mrb[0].mxu0 %v1573
    %v1752 = vpop.f32.mrb[0].mxu0
    %v1753 = vadd.f32 %v1483, %v1752
    %v1754 = vpop.f32.mrb[0].mxu0
    %v1755 = vadd.f32 %v1487, %v1754
    %v1756 = vpop.f32.mrb[0].mxu0
    %v1757 = vadd.f32 %v1483, %v1756
    %v1758 = vpop.f32.mrb[0].mxu0
    %v1759 = vadd.f32 %v1487, %v1758
    %1760 = vmatprep.mubr.bf16.mxu0 0
    %1761 = vmatmul.mubr.bf16.gmra.mrb[0].mxu0 %v1576
    %v1762 = vpop.f32.mrb[0].mxu0
    %v1763 = vadd.f32 %v1483, %v1762
    %v1764 = vpop.f32.mrb[0].mxu0
    %v1765 = vadd.f32 %v1487, %v1764
    %v1766 = vpop.f32.mrb[0].mxu0
    %v1767 = vadd.f32 %v1483, %v1766
    %v1768 = vpop.f32.mrb[0].mxu0
    %v1769 = vadd.f32 %v1487, %v1768
    %1770 = vdwg.mxu0
    %v1771 = vmax.f32 %v1613, 0.0
    %v1772 = vmax.f32 %v1615, 0.0
    %v1773 = vmax.f32 %v1617, 0.0
    %v1774 = vmax.f32 %v1619, 0.0
    %v1775 = vmax.f32 %v1623, 0.0
    %v1776 = vmax.f32 %v1625, 0.0
    %v1777 = vmax.f32 %v1627, 0.0
    %v1778 = vmax.f32 %v1629, 0.0
    %v1779 = vmax.f32 %v1633, 0.0
    %v1780 = vmax.f32 %v1635, 0.0
    %v1781 = vmax.f32 %v1637, 0.0
    %v1782 = vmax.f32 %v1639, 0.0
    %v1783 = vmax.f32 %v1643, 0.0
    %v1784 = vmax.f32 %v1645, 0.0
    %v1785 = vmax.f32 %v1647, 0.0
    %v1786 = vmax.f32 %v1649, 0.0
    %v1787 = vmax.f32 %v1653, 0.0
    %v1788 = vmax.f32 %v1655, 0.0
    %v1789 = vmax.f32 %v1657, 0.0
    %v1790 = vmax.f32 %v1659, 0.0
    %v1791 = vmax.f32 %v1663, 0.0
    %v1792 = vmax.f32 %v1665, 0.0
    %v1793 = vmax.f32 %v1667, 0.0
    %v1794 = vmax.f32 %v1669, 0.0
    %v1795 = vmax.f32 %v1673, 0.0
    %v1796 = vmax.f32 %v1675, 0.0
    %v1797 = vmax.f32 %v1677, 0.0
    %v1798 = vmax.f32 %v1679, 0.0
    %v1799 = vmax.f32 %v1683, 0.0
    %v1800 = vmax.f32 %v1685, 0.0
    %v1801 = vmax.f32 %v1687, 0.0
    %v1802 = vmax.f32 %v1689, 0.0
    %v1803 = vmax.f32 %v1693, 0.0
    %v1804 = vmax.f32 %v1695, 0.0
    %v1805 = vmax.f32 %v1697, 0.0
    %v1806 = vmax.f32 %v1699, 0.0
    %v1807 = vmax.f32 %v1703, 0.0
    %v1808 = vmax.f32 %v1705, 0.0
    %v1809 = vmax.f32 %v1707, 0.0
    %v1810 = vmax.f32 %v1709, 0.0
    %v1811 = vmax.f32 %v1713, 0.0
    %v1812 = vmax.f32 %v1715, 0.0
    %v1813 = vmax.f32 %v1717, 0.0
    %v1814 = vmax.f32 %v1719, 0.0
    %v1815 = vmax.f32 %v1723, 0.0
    %v1816 = vmax.f32 %v1725, 0.0
    %v1817 = vmax.f32 %v1727, 0.0
    %v1818 = vmax.f32 %v1729, 0.0
    %v1819 = vmax.f32 %v1733, 0.0
    %v1820 = vmax.f32 %v1735, 0.0
    %v1821 = vmax.f32 %v1737, 0.0
    %v1822 = vmax.f32 %v1739, 0.0
    %v1823 = vmax.f32 %v1743, 0.0
    %v1824 = vmax.f32 %v1745, 0.0
    %v1825 = vmax.f32 %v1747, 0.0
    %v1826 = vmax.f32 %v1749, 0.0
    %v1827 = vmax.f32 %v1753, 0.0
    %v1828 = vmax.f32 %v1755, 0.0
    %v1829 = vmax.f32 %v1757, 0.0
    %v1830 = vmax.f32 %v1759, 0.0
    %v1831 = vmax.f32 %v1763, 0.0
    %v1832 = vmax.f32 %v1765, 0.0
    %v1833 = vmax.f32 %v1767, 0.0
    %v1834 = vmax.f32 %v1769, 0.0
    %v1835 = vxor.u32 %v1771, 2147483648
    %v1836 = vxor.u32 %v1772, 2147483648
    %v1837 = vxor.u32 %v1773, 2147483648
    %v1838 = vxor.u32 %v1774, 2147483648
    %v1839 = vxor.u32 %v1775, 2147483648
    %v1840 = vxor.u32 %v1776, 2147483648
    %v1841 = vxor.u32 %v1777, 2147483648
    %v1842 = vxor.u32 %v1778, 2147483648
    %v1843 = vxor.u32 %v1779, 2147483648
    %v1844 = vxor.u32 %v1780, 2147483648
    %v1845 = vxor.u32 %v1781, 2147483648
    %v1846 = vxor.u32 %v1782, 2147483648
    %v1847 = vxor.u32 %v1783, 2147483648
    %v1848 = vxor.u32 %v1784, 2147483648
    %v1849 = vxor.u32 %v1785, 2147483648
    %v1850 = vxor.u32 %v1786, 2147483648
    %v1851 = vxor.u32 %v1787, 2147483648
    %v1852 = vxor.u32 %v1788, 2147483648
    %v1853 = vxor.u32 %v1789, 2147483648
    %v1854 = vxor.u32 %v1790, 2147483648
    %v1855 = vxor.u32 %v1791, 2147483648
    %v1856 = vxor.u32 %v1792, 2147483648
    %v1857 = vxor.u32 %v1793, 2147483648
    %v1858 = vxor.u32 %v1794, 2147483648
    %v1859 = vxor.u32 %v1795, 2147483648
    %v1860 = vxor.u32 %v1796, 2147483648
    %v1861 = vxor.u32 %v1797, 2147483648
    %v1862 = vxor.u32 %v1798, 2147483648
    %v1863 = vxor.u32 %v1799, 2147483648
    %v1864 = vxor.u32 %v1800, 2147483648
    %v1865 = vxor.u32 %v1801, 2147483648
    %v1866 = vxor.u32 %v1802, 2147483648
    %v1867 = vxor.u32 %v1803, 2147483648
    %v1868 = vxor.u32 %v1804, 2147483648
    %v1869 = vxor.u32 %v1805, 2147483648
    %v1870 = vxor.u32 %v1806, 2147483648
    %v1871 = vxor.u32 %v1807, 2147483648
    %v1872 = vxor.u32 %v1808, 2147483648
    %v1873 = vxor.u32 %v1809, 2147483648
    %v1874 = vxor.u32 %v1810, 2147483648
    %v1875 = vxor.u32 %v1811, 2147483648
    %v1876 = vxor.u32 %v1812, 2147483648
    %v1877 = vxor.u32 %v1813, 2147483648
    %v1878 = vxor.u32 %v1814, 2147483648
    %v1879 = vxor.u32 %v1815, 2147483648
    %v1880 = vxor.u32 %v1816, 2147483648
    %v1881 = vxor.u32 %v1817, 2147483648
    %v1882 = vxor.u32 %v1818, 2147483648
    %v1883 = vxor.u32 %v1819, 2147483648
    %v1884 = vxor.u32 %v1820, 2147483648
    %v1885 = vxor.u32 %v1821, 2147483648
    %v1886 = vxor.u32 %v1822, 2147483648
    %v1887 = vxor.u32 %v1823, 2147483648
    %v1888 = vxor.u32 %v1824, 2147483648
    %v1889 = vxor.u32 %v1825, 2147483648
    %v1890 = vxor.u32 %v1826, 2147483648
    %v1891 = vxor.u32 %v1827, 2147483648
    %v1892 = vxor.u32 %v1828, 2147483648
    %v1893 = vxor.u32 %v1829, 2147483648
    %v1894 = vxor.u32 %v1830, 2147483648
    %v1895 = vxor.u32 %v1831, 2147483648
    %v1896 = vxor.u32 %v1832, 2147483648
    %v1897 = vxor.u32 %v1833, 2147483648
    %v1898 = vxor.u32 %v1834, 2147483648
    %v1899 = vmul.f32 %v1835, 1.442695
    %v1900 = vpow.pop %v1899
    %v1901 = vmul.f32 %v1836, 1.442695
    %v1902 = vpow.pop %v1901
    %v1903 = vmul.f32 %v1837, 1.442695
    %v1904 = vpow.pop %v1903
    %v1905 = vmul.f32 %v1838, 1.442695
    %v1906 = vpow.pop %v1905
    %v1907 = vmul.f32 %v1839, 1.442695
    %v1908 = vpow.pop %v1907
    %v1909 = vmul.f32 %v1840, 1.442695
    %v1910 = vpow.pop %v1909
    %v1911 = vmul.f32 %v1841, 1.442695
    %v1912 = vpow.pop %v1911
    %v1913 = vmul.f32 %v1842, 1.442695
    %v1914 = vpow.pop %v1913
    %v1915 = vmul.f32 %v1843, 1.442695
    %v1916 = vpow.pop %v1915
    %v1917 = vmul.f32 %v1844, 1.442695
    %v1918 = vpow.pop %v1917
    %v1919 = vmul.f32 %v1845, 1.442695
    %v1920 = vpow.pop %v1919
    %v1921 = vmul.f32 %v1846, 1.442695
    %v1922 = vpow.pop %v1921
    %v1923 = vmul.f32 %v1847, 1.442695
    %v1924 = vpow.pop %v1923
    %v1925 = vmul.f32 %v1848, 1.442695
    %v1926 = vpow.pop %v1925
    %v1927 = vmul.f32 %v1849, 1.442695
    %v1928 = vpow.pop %v1927
    %v1929 = vmul.f32 %v1850, 1.442695
    %v1930 = vpow.pop %v1929
    %v1931 = vmul.f32 %v1851, 1.442695
    %v1932 = vpow.pop %v1931
    %v1933 = vmul.f32 %v1852, 1.442695
    %v1934 = vpow.pop %v1933
    %v1935 = vmul.f32 %v1853, 1.442695
    %v1936 = vpow.pop %v1935
    %v1937 = vmul.f32 %v1854, 1.442695
    %v1938 = vpow.pop %v1937
    %v1939 = vmul.f32 %v1855, 1.442695
    %v1940 = vpow.pop %v1939
    %v1941 = vmul.f32 %v1856, 1.442695
    %v1942 = vpow.pop %v1941
    %v1943 = vmul.f32 %v1857, 1.442695
    %v1944 = vpow.pop %v1943
    %v1945 = vmul.f32 %v1858, 1.442695
    %v1946 = vpow.pop %v1945
    %v1947 = vmul.f32 %v1859, 1.442695
    %v1948 = vpow.pop %v1947
    %v1949 = vmul.f32 %v1860, 1.442695
    %v1950 = vpow.pop %v1949
    %v1951 = vmul.f32 %v1861, 1.442695
    %v1952 = vpow.pop %v1951
    %v1953 = vmul.f32 %v1862, 1.442695
    %v1954 = vpow.pop %v1953
    %v1955 = vmul.f32 %v1863, 1.442695
    %v1956 = vpow.pop %v1955
    %v1957 = vmul.f32 %v1864, 1.442695
    %v1958 = vpow.pop %v1957
    %v1959 = vmul.f32 %v1865, 1.442695
    %v1960 = vpow.pop %v1959
    %v1961 = vmul.f32 %v1866, 1.442695
    %v1962 = vpow.pop %v1961
    %v1963 = vmul.f32 %v1867, 1.442695
    %v1964 = vpow.pop %v1963
    %v1965 = vmul.f32 %v1868, 1.442695
    %v1966 = vpow.pop %v1965
    %v1967 = vmul.f32 %v1869, 1.442695
    %v1968 = vpow.pop %v1967
    %v1969 = vmul.f32 %v1870, 1.442695
    %v1970 = vpow.pop %v1969
    %v1971 = vmul.f32 %v1871, 1.442695
    %v1972 = vpow.pop %v1971
    %v1973 = vmul.f32 %v1872, 1.442695
    %v1974 = vpow.pop %v1973
    %v1975 = vmul.f32 %v1873, 1.442695
    %v1976 = vpow.pop %v1975
    %v1977 = vmul.f32 %v1874, 1.442695
    %v1978 = vpow.pop %v1977
    %v1979 = vmul.f32 %v1875, 1.442695
    %v1980 = vpow.pop %v1979
    %v1981 = vmul.f32 %v1876, 1.442695
    %v1982 = vpow.pop %v1981
    %v1983 = vmul.f32 %v1877, 1.442695
    %v1984 = vpow.pop %v1983
    %v1985 = vmul.f32 %v1878, 1.442695
    %v1986 = vpow.pop %v1985
    %v1987 = vmul.f32 %v1879, 1.442695
    %v1988 = vpow.pop %v1987
    %v1989 = vmul.f32 %v1880, 1.442695
    %v1990 = vpow.pop %v1989
    %v1991 = vmul.f32 %v1881, 1.442695
    %v1992 = vpow.pop %v1991
    %v1993 = vmul.f32 %v1882, 1.442695
    %v1994 = vpow.pop %v1993
    %v1995 = vmul.f32 %v1883, 1.442695
    %v1996 = vpow.pop %v1995
    %v1997 = vmul.f32 %v1884, 1.442695
    %v1998 = vpow.pop %v1997
    %v1999 = vmul.f32 %v1885, 1.442695
    %v2000 = vpow.pop %v1999
    %v2001 = vmul.f32 %v1886, 1.442695
    %v2002 = vpow.pop %v2001
    %v2003 = vmul.f32 %v1887, 1.442695
    %v2004 = vpow.pop %v2003
    %v2005 = vmul.f32 %v1888, 1.442695
    %v2006 = vpow.pop %v2005
    %v2007 = vmul.f32 %v1889, 1.442695
    %v2008 = vpow.pop %v2007
    %v2009 = vmul.f32 %v1890, 1.442695
    %v2010 = vpow.pop %v2009
    %v2011 = vmul.f32 %v1891, 1.442695
    %v2012 = vpow.pop %v2011
    %v2013 = vmul.f32 %v1892, 1.442695
    %v2014 = vpow.pop %v2013
    %v2015 = vmul.f32 %v1893, 1.442695
    %v2016 = vpow.pop %v2015
    %v2017 = vmul.f32 %v1894, 1.442695
    %v2018 = vpow.pop %v2017
    %v2019 = vmul.f32 %v1895, 1.442695
    %v2020 = vpow.pop %v2019
    %v2021 = vmul.f32 %v1896, 1.442695
    %v2022 = vpow.pop %v2021
    %v2023 = vmul.f32 %v1897, 1.442695
    %v2024 = vpow.pop %v2023
    %v2025 = vmul.f32 %v1898, 1.442695
    %v2026 = vpow.pop %v2025
    %v2027 = vadd.f32 %v1900, 1.0
    %v2028 = vadd.f32 %v1902, 1.0
    %v2029 = vadd.f32 %v1904, 1.0
    %v2030 = vadd.f32 %v1906, 1.0
    %v2031 = vadd.f32 %v1908, 1.0
    %v2032 = vadd.f32 %v1910, 1.0
    %v2033 = vadd.f32 %v1912, 1.0
    %v2034 = vadd.f32 %v1914, 1.0
    %v2035 = vadd.f32 %v1916, 1.0
    %v2036 = vadd.f32 %v1918, 1.0
    %v2037 = vadd.f32 %v1920, 1.0
    %v2038 = vadd.f32 %v1922, 1.0
    %v2039 = vadd.f32 %v1924, 1.0
    %v2040 = vadd.f32 %v1926, 1.0
    %v2041 = vadd.f32 %v1928, 1.0
    %v2042 = vadd.f32 %v1930, 1.0
    %v2043 = vadd.f32 %v1932, 1.0
    %v2044 = vadd.f32 %v1934, 1.0
    %v2045 = vadd.f32 %v1936, 1.0
    %v2046 = vadd.f32 %v1938, 1.0
    %v2047 = vadd.f32 %v1940, 1.0
    %v2048 = vadd.f32 %v1942, 1.0
    %v2049 = vadd.f32 %v1944, 1.0
    %v2050 = vadd.f32 %v1946, 1.0
    %v2051 = vadd.f32 %v1948, 1.0
    %v2052 = vadd.f32 %v1950, 1.0
    %v2053 = vadd.f32 %v1952, 1.0
    %v2054 = vadd.f32 %v1954, 1.0
    %v2055 = vadd.f32 %v1956, 1.0
    %v2056 = vadd.f32 %v1958, 1.0
    %v2057 = vadd.f32 %v1960, 1.0
    %v2058 = vadd.f32 %v1962, 1.0
    %v2059 = vadd.f32 %v1964, 1.0
    %v2060 = vadd.f32 %v1966, 1.0
    %v2061 = vadd.f32 %v1968, 1.0
    %v2062 = vadd.f32 %v1970, 1.0
    %v2063 = vadd.f32 %v1972, 1.0
    %v2064 = vadd.f32 %v1974, 1.0
    %v2065 = vadd.f32 %v1976, 1.0
    %v2066 = vadd.f32 %v1978, 1.0
    %v2067 = vadd.f32 %v1980, 1.0
    %v2068 = vadd.f32 %v1982, 1.0
    %v2069 = vadd.f32 %v1984, 1.0
    %v2070 = vadd.f32 %v1986, 1.0
    %v2071 = vadd.f32 %v1988, 1.0
    %v2072 = vadd.f32 %v1990, 1.0
    %v2073 = vadd.f32 %v1992, 1.0
    %v2074 = vadd.f32 %v1994, 1.0
    %v2075 = vadd.f32 %v1996, 1.0
    %v2076 = vadd.f32 %v1998, 1.0
    %v2077 = vadd.f32 %v2000, 1.0
    %v2078 = vadd.f32 %v2002, 1.0
    %v2079 = vadd.f32 %v2004, 1.0
    %v2080 = vadd.f32 %v2006, 1.0
    %v2081 = vadd.f32 %v2008, 1.0
    %v2082 = vadd.f32 %v2010, 1.0
    %v2083 = vadd.f32 %v2012, 1.0
    %v2084 = vadd.f32 %v2014, 1.0
    %v2085 = vadd.f32 %v2016, 1.0
    %v2086 = vadd.f32 %v2018, 1.0
    %v2087 = vadd.f32 %v2020, 1.0
    %v2088 = vadd.f32 %v2022, 1.0
    %v2089 = vadd.f32 %v2024, 1.0
    %v2090 = vadd.f32 %v2026, 1.0
    %v2091 = vrcp.pop %v2027
    %v2092 = vmul.f32 1.0, %v2091
    %v2093 = vrcp.pop %v2028
    %v2094 = vmul.f32 1.0, %v2093
    %v2095 = vrcp.pop %v2029
    %v2096 = vmul.f32 1.0, %v2095
    %v2097 = vrcp.pop %v2030
    %v2098 = vmul.f32 1.0, %v2097
    %v2099 = vrcp.pop %v2031
    %v2100 = vmul.f32 1.0, %v2099
    %v2101 = vrcp.pop %v2032
    %v2102 = vmul.f32 1.0, %v2101
    %v2103 = vrcp.pop %v2033
    %v2104 = vmul.f32 1.0, %v2103
    %v2105 = vrcp.pop %v2034
    %v2106 = vmul.f32 1.0, %v2105
    %v2107 = vrcp.pop %v2035
    %v2108 = vmul.f32 1.0, %v2107
    %v2109 = vrcp.pop %v2036
    %v2110 = vmul.f32 1.0, %v2109
    %v2111 = vrcp.pop %v2037
    %v2112 = vmul.f32 1.0, %v2111
    %v2113 = vrcp.pop %v2038
    %v2114 = vmul.f32 1.0, %v2113
    %v2115 = vrcp.pop %v2039
    %v2116 = vmul.f32 1.0, %v2115
    %v2117 = vrcp.pop %v2040
    %v2118 = vmul.f32 1.0, %v2117
    %v2119 = vrcp.pop %v2041
    %v2120 = vmul.f32 1.0, %v2119
    %v2121 = vrcp.pop %v2042
    %v2122 = vmul.f32 1.0, %v2121
    %v2123 = vrcp.pop %v2043
    %v2124 = vmul.f32 1.0, %v2123
    %v2125 = vrcp.pop %v2044
    %v2126 = vmul.f32 1.0, %v2125
    %v2127 = vrcp.pop %v2045
    %v2128 = vmul.f32 1.0, %v2127
    %v2129 = vrcp.pop %v2046
    %v2130 = vmul.f32 1.0, %v2129
    %v2131 = vrcp.pop %v2047
    %v2132 = vmul.f32 1.0, %v2131
    %v2133 = vrcp.pop %v2048
    %v2134 = vmul.f32 1.0, %v2133
    %v2135 = vrcp.pop %v2049
    %v2136 = vmul.f32 1.0, %v2135
    %v2137 = vrcp.pop %v2050
    %v2138 = vmul.f32 1.0, %v2137
    %v2139 = vrcp.pop %v2051
    %v2140 = vmul.f32 1.0, %v2139
    %v2141 = vrcp.pop %v2052
    %v2142 = vmul.f32 1.0, %v2141
    %v2143 = vrcp.pop %v2053
    %v2144 = vmul.f32 1.0, %v2143
    %v2145 = vrcp.pop %v2054
    %v2146 = vmul.f32 1.0, %v2145
    %v2147 = vrcp.pop %v2055
    %v2148 = vmul.f32 1.0, %v2147
    %v2149 = vrcp.pop %v2056
    %v2150 = vmul.f32 1.0, %v2149
    %v2151 = vrcp.pop %v2057
    %v2152 = vmul.f32 1.0, %v2151
    %v2153 = vrcp.pop %v2058
    %v2154 = vmul.f32 1.0, %v2153
    %v2155 = vrcp.pop %v2059
    %v2156 = vmul.f32 1.0, %v2155
    %v2157 = vrcp.pop %v2060
    %v2158 = vmul.f32 1.0, %v2157
    %v2159 = vrcp.pop %v2061
    %v2160 = vmul.f32 1.0, %v2159
    %v2161 = vrcp.pop %v2062
    %v2162 = vmul.f32 1.0, %v2161
    %v2163 = vrcp.pop %v2063
    %v2164 = vmul.f32 1.0, %v2163
    %v2165 = vrcp.pop %v2064
    %v2166 = vmul.f32 1.0, %v2165
    %v2167 = vrcp.pop %v2065
    %v2168 = vmul.f32 1.0, %v2167
    %v2169 = vrcp.pop %v2066
    %v2170 = vmul.f32 1.0, %v2169
    %v2171 = vrcp.pop %v2067
    %v2172 = vmul.f32 1.0, %v2171
    %v2173 = vrcp.pop %v2068
    %v2174 = vmul.f32 1.0, %v2173
    %v2175 = vrcp.pop %v2069
    %v2176 = vmul.f32 1.0, %v2175
    %v2177 = vrcp.pop %v2070
    %v2178 = vmul.f32 1.0, %v2177
    %v2179 = vrcp.pop %v2071
    %v2180 = vmul.f32 1.0, %v2179
    %v2181 = vrcp.pop %v2072
    %v2182 = vmul.f32 1.0, %v2181
    %v2183 = vrcp.pop %v2073
    %v2184 = vmul.f32 1.0, %v2183
    %v2185 = vrcp.pop %v2074
    %v2186 = vmul.f32 1.0, %v2185
    %v2187 = vrcp.pop %v2075
    %v2188 = vmul.f32 1.0, %v2187
    %v2189 = vrcp.pop %v2076
    %v2190 = vmul.f32 1.0, %v2189
    %v2191 = vrcp.pop %v2077
    %v2192 = vmul.f32 1.0, %v2191
    %v2193 = vrcp.pop %v2078
    %v2194 = vmul.f32 1.0, %v2193
    %v2195 = vrcp.pop %v2079
    %v2196 = vmul.f32 1.0, %v2195
    %v2197 = vrcp.pop %v2080
    %v2198 = vmul.f32 1.0, %v2197
    %v2199 = vrcp.pop %v2081
    %v2200 = vmul.f32 1.0, %v2199
    %v2201 = vrcp.pop %v2082
    %v2202 = vmul.f32 1.0, %v2201
    %v2203 = vrcp.pop %v2083
    %v2204 = vmul.f32 1.0, %v2203
    %v2205 = vrcp.pop %v2084
    %v2206 = vmul.f32 1.0, %v2205
    %v2207 = vrcp.pop %v2085
    %v2208 = vmul.f32 1.0, %v2207
    %v2209 = vrcp.pop %v2086
    %v2210 = vmul.f32 1.0, %v2209
    %v2211 = vrcp.pop %v2087
    %v2212 = vmul.f32 1.0, %v2211
    %v2213 = vrcp.pop %v2088
    %v2214 = vmul.f32 1.0, %v2213
    %v2215 = vrcp.pop %v2089
    %v2216 = vmul.f32 1.0, %v2215
    %v2217 = vrcp.pop %v2090
    %v2218 = vmul.f32 1.0, %v2217
    %2219 = vst [vmem:[#allocation7] sm:$0xff] %v2092
    %2220 = vst [vmem:[#allocation7 + $0x8] sm:$0xff] %v2094
    %2221 = vst [vmem:[#allocation7 + $0x10] sm:$0xff] %v2096
    %2222 = vst [vmem:[#allocation7 + $0x18] sm:$0xff] %v2098
    %2223 = vst [vmem:[#allocation7 + $0x20] sm:$0xff] %v2100
    %2224 = vst [vmem:[#allocation7 + $0x28] sm:$0xff] %v2102
    %2225 = vst [vmem:[#allocation7 + $0x30] sm:$0xff] %v2104
    %2226 = vst [vmem:[#allocation7 + $0x38] sm:$0xff] %v2106
    %2227 = vst [vmem:[#allocation7 + $0x40] sm:$0xff] %v2108
    %2228 = vst [vmem:[#allocation7 + $0x48] sm:$0xff] %v2110
    %2229 = vst [vmem:[#allocation7 + $0x50] sm:$0xff] %v2112
    %2230 = vst [vmem:[#allocation7 + $0x58] sm:$0xff] %v2114
    %2231 = vst [vmem:[#allocation7 + $0x60] sm:$0xff] %v2116
    %2232 = vst [vmem:[#allocation7 + $0x68] sm:$0xff] %v2118
    %2233 = vst [vmem:[#allocation7 + $0x70] sm:$0xff] %v2120
    %2234 = vst [vmem:[#allocation7 + $0x78] sm:$0xff] %v2122
    %2235 = vst [vmem:[#allocation7 + $0x80] sm:$0xff] %v2124
    %2236 = vst [vmem:[#allocation7 + $0x88] sm:$0xff] %v2126
    %2237 = vst [vmem:[#allocation7 + $0x90] sm:$0xff] %v2128
    %2238 = vst [vmem:[#allocation7 + $0x98] sm:$0xff] %v2130
    %2239 = vst [vmem:[#allocation7 + $0xa0] sm:$0xff] %v2132
    %2240 = vst [vmem:[#allocation7 + $0xa8] sm:$0xff] %v2134
    %2241 = vst [vmem:[#allocation7 + $0xb0] sm:$0xff] %v2136
    %2242 = vst [vmem:[#allocation7 + $0xb8] sm:$0xff] %v2138
    %2243 = vst [vmem:[#allocation7 + $0xc0] sm:$0xff] %v2140
    %2244 = vst [vmem:[#allocation7 + $0xc8] sm:$0xff] %v2142
    %2245 = vst [vmem:[#allocation7 + $0xd0] sm:$0xff] %v2144
    %2246 = vst [vmem:[#allocation7 + $0xd8] sm:$0xff] %v2146
    %2247 = vst [vmem:[#allocation7 + $0xe0] sm:$0xff] %v2148
    %2248 = vst [vmem:[#allocation7 + $0xe8] sm:$0xff] %v2150
    %2249 = vst [vmem:[#allocation7 + $0xf0] sm:$0xff] %v2152
    %2250 = vst [vmem:[#allocation7 + $0xf8] sm:$0xff] %v2154
    %2251 = vst [vmem:[#allocation7 + $0x100] sm:$0xff] %v2156
    %2252 = vst [vmem:[#allocation7 + $0x108] sm:$0xff] %v2158
    %2253 = vst [vmem:[#allocation7 + $0x110] sm:$0xff] %v2160
    %2254 = vst [vmem:[#allocation7 + $0x118] sm:$0xff] %v2162
    %2255 = vst [vmem:[#allocation7 + $0x120] sm:$0xff] %v2164
    %2256 = vst [vmem:[#allocation7 + $0x128] sm:$0xff] %v2166
    %2257 = vst [vmem:[#allocation7 + $0x130] sm:$0xff] %v2168
    %2258 = vst [vmem:[#allocation7 + $0x138] sm:$0xff] %v2170
    %2259 = vst [vmem:[#allocation7 + $0x140] sm:$0xff] %v2172
    %2260 = vst [vmem:[#allocation7 + $0x148] sm:$0xff] %v2174
    %2261 = vst [vmem:[#allocation7 + $0x150] sm:$0xff] %v2176
    %2262 = vst [vmem:[#allocation7 + $0x158] sm:$0xff] %v2178
    %2263 = vst [vmem:[#allocation7 + $0x160] sm:$0xff] %v2180
    %2264 = vst [vmem:[#allocation7 + $0x168] sm:$0xff] %v2182
    %2265 = vst [vmem:[#allocation7 + $0x170] sm:$0xff] %v2184
    %2266 = vst [vmem:[#allocation7 + $0x178] sm:$0xff] %v2186
    %2267 = vst [vmem:[#allocation7 + $0x180] sm:$0xff] %v2188
    %2268 = vst [vmem:[#allocation7 + $0x188] sm:$0xff] %v2190
    %2269 = vst [vmem:[#allocation7 + $0x190] sm:$0xff] %v2192
    %2270 = vst [vmem:[#allocation7 + $0x198] sm:$0xff] %v2194
    %2271 = vst [vmem:[#allocation7 + $0x1a0] sm:$0xff] %v2196
    %2272 = vst [vmem:[#allocation7 + $0x1a8] sm:$0xff] %v2198
    %2273 = vst [vmem:[#allocation7 + $0x1b0] sm:$0xff] %v2200
    %2274 = vst [vmem:[#allocation7 + $0x1b8] sm:$0xff] %v2202
    %2275 = vst [vmem:[#allocation7 + $0x1c0] sm:$0xff] %v2204
    %2276 = vst [vmem:[#allocation7 + $0x1c8] sm:$0xff] %v2206
    %2277 = vst [vmem:[#allocation7 + $0x1d0] sm:$0xff] %v2208
    %2278 = vst [vmem:[#allocation7 + $0x1d8] sm:$0xff] %v2210
    %2279 = vst [vmem:[#allocation7 + $0x1e0] sm:$0xff] %v2212
    %2280 = vst [vmem:[#allocation7 + $0x1e8] sm:$0xff] %v2214
    %2281 = vst [vmem:[#allocation7 + $0x1f0] sm:$0xff] %v2216
    %2282 = vst [vmem:[#allocation7 + $0x1f8] sm:$0xff] %v2218
    // Predicated region
    $region50: #{tpu_custom_call.1} parent=1 // pred_check
      _
    $region51: #{tpu_custom_call.1} parent=1 // pred_check_branch
      %2284 = sbr.rel (0) target = $region53
    $region52: #{tpu_custom_call.1} parent=1 // pred_region
      %s2286 = ssub.s32 8192, 8192
      %2287 = vsyncadd [#allocation4], %s2286
      %s2288 = sshll.u32 [#allocation7], 4
      %s2289 = int_to_ptr.vmem [resolvable:$true] %s2288
      %2294 = dma.vmem_to_hbm [thread:$0]  %s2289, 8192, %s10, [#allocation4], 256, 256, 16
    $region53: #{tpu_custom_call.1} parent=1 // pred_fallthru
      _
    // Predicated region
    $region54: #{tpu_custom_call.1} parent=1 // pred_check
      _
    $region55: #{tpu_custom_call.1} parent=1 // pred_check_branch
      %2296 = sbr.rel (0) target = $region57
    $region56: #{tpu_custom_call.1} parent=1 // pred_region
      %s2298 = ssub.s32 4096, 4096
      %2299 = vsyncadd [#allocation9], %s2298
      %s2300 = sshll.u32 [#allocation8], 4
      %s2301 = int_to_ptr.vmem [resolvable:$true] %s2300
      %2306 = dma.vmem_to_hbm [thread:$0]  %s2301, 4096, %s11, [#allocation9], 128, 128, 8
    $region57: #{tpu_custom_call.1} parent=1 // pred_fallthru
      _
    // Predicated region
    $region58: #{tpu_custom_call.1} parent=1 // pred_check
      _
    $region59: #{tpu_custom_call.1} parent=1 // pred_check_branch
      %2308 = sbr.rel (0) target = $region61
    $region60: #{tpu_custom_call.1} parent=1 // pred_region
      %2309 = dma.done [#allocation4], 8192
    $region61: #{tpu_custom_call.1} parent=1 // pred_fallthru
      _
    // Predicated region
    $region62: #{tpu_custom_call.1} parent=1 // pred_check
      _
    $region63: #{tpu_custom_call.1} parent=1 // pred_check_branch
      %2311 = sbr.rel (0) target = $region65
    $region64: #{tpu_custom_call.1} parent=1 // pred_region
      %2312 = dma.done [#allocation9], 4096
    $region65: #{tpu_custom_call.1} parent=1 // pred_fallthru
      _
    %2313 = vsyncpa [#allocation3], 1
    %2314 = vsyncpa [#allocation6], 1
    %2315 = vsyncpa [#allocation4], 1
    %2316 = vsyncpa [#allocation9], 1

</llo_original>
